<compile_context>
chip_gen: v6e
topology: v6e:2x2x1
jax: 0.10.0
libtpu: 0.0.40
codegen_flags: <defaults>
</compile_context>

<pallas_src>
import jax
import jax.numpy as jnp
from jax import lax
from jax.experimental import pallas as pl
from jax.experimental.pallas import tpu as pltpu


LEAKY_SLOPE = 0.1   # nn.LeakyReLU(0.1) throughout the module
CPAD = 16           # channel padding so packed-bf16 sublane tiles stay aligned


def _leaky(x, slope=LEAKY_SLOPE):
    return jnp.where(x >= 0, x, slope * x)


def _weight_norm(v, g):
    # torch.nn.utils.weight_norm (dim=0): per-output-channel norm over (in, k)
    nrm = jnp.sqrt(jnp.sum(v * v, axis=(1, 2), keepdims=True))
    return g * v / nrm


def _round_up(n, m):
    return ((n + m - 1) // m) * m


def _pick_block_b(B, L, max_lanes=1024):
    divs = [d for d in range(1, B + 1) if B % d == 0]
    # Keep at least 2 grid steps when B >= 2 so both v7x TensorCores get work.
    cands = [d for d in divs if B // d >= 2] or divs
    fit = [d for d in cands if d * L <= max_lanes]
    return max(fit) if fit else min(cands)


# ---------------------------------------------------------------------------
# Fully fused TCN kernel: all TemporalBlocks + Linear head in one grid step.
# ---------------------------------------------------------------------------
def make_tcn_kernel(layer_cfgs, K, L, block_b, n_in):
    N = block_b * L  # lane width of every matmul in the kernel

    def conv_im2col(act, w_ref, b_ref, c_inp, d, p, slab_ref):
        # act: (c_inp, N) bf16 value.  Build the (K*c_inp, N) im2col slab in
        # bf16 VMEM scratch (per-tap causal shift with zero left-pad) and do a
        # single MXU matmul; bias broadcast happens once per conv.
        for j in range(K):                       # static unroll over taps
            z = min(p - j * d, L)                # leading zero cols of this tap
            r0 = j * c_inp
            for bi in range(block_b):            # static unroll over batch tile
                c0 = bi * L
                if z > 0:
                    slab_ref[r0:r0 + c_inp, c0:c0 + z] = jnp.zeros(
                        (c_inp, z), jnp.bfloat16)
                if z < L:
                    slab_ref[r0:r0 + c_inp, c0 + z:c0 + L] = act[:, c0:c0 + L - z]
        return jnp.dot(w_ref[...], slab_ref[0:K * c_inp, :],
                       preferred_element_type=jnp.float32) + b_ref[...]

    def kernel(*refs):
        x_ref = refs[0]
        o_ref = refs[n_in]
        slab_ref = refs[n_in + 1]

        # Fold the batch tile into the lane dimension: act is (C, block_b*L).
        if block_b == 1:
            act = x_ref[0]
        else:
            act = jnp.concatenate([x_ref[bi] for bi in range(block_b)], axis=1)

        idx = 1
        for (c_inp, c_outp, d, p, has_down) in layer_cfgs:   # static over layers
            w1, b1, w2, b2 = refs[idx], refs[idx + 1], refs[idx + 2], refs[idx + 3]
            idx += 4
            if has_down:
                wd, bd = refs[idx], refs[idx + 1]
                idx += 2

            h = _leaky(conv_im2col(act, w1, b1, c_inp, d, p, slab_ref))
            # TODO(synk): Dropout(p=0.2) is identity in eval-mode forward.
            h = _leaky(conv_im2col(h.astype(jnp.bfloat16), w2, b2, c_outp, d, p,
                                   slab_ref))
            if has_down:
                res = jnp.dot(wd[...], act,
                              preferred_element_type=jnp.float32) + bd[...]
            else:
                res = act.astype(jnp.float32)    # identity residual, no matmul
            act = _leaky(h + res).astype(jnp.bfloat16)

        # Final Linear head, fused: y = W @ act + b  -> (O_pad, block_b*L)
        wl, bl = refs[idx], refs[idx + 1]
        y = jnp.dot(wl[...], act, preferred_element_type=jnp.float32) + bl[...]
        for bi in range(block_b):
            o_ref[bi] = y[:, bi * L:(bi + 1) * L]

    return kernel


@jax.jit
def tcn_forward(x, params):
    """x: (B, L, input_size) f32 (channel_last=True) -> (B, L, output_size) f32."""
    B, L, c_in = x.shape
    K = params["blocks"][0]["v1"].shape[-1]
    O = params["lin_w"].shape[0]
    block_b = _pick_block_b(B, L)

    c0p = _round_up(c_in, CPAD)
    # NCL layout, zero-padded channels, bf16 MXU feed.
    x_ncl = jnp.transpose(x, (0, 2, 1))
    x_ncl = jnp.pad(x_ncl, ((0, 0), (0, c0p - c_in), (0, 0))).astype(jnp.bfloat16)

    args = [x_ncl]
    in_specs = [pl.BlockSpec((block_b, c0p, L), lambda i: (i, 0, 0))]
    layer_cfgs = []
    c_prev, c_prevp = c_in, c0p

    for li, blk in enumerate(params["blocks"]):
        c_out = blk["v1"].shape[0]
        c_outp = _round_up(c_out, CPAD)
        d = 2 ** li
        p = (K - 1) * d
        has_down = "wd" in blk

        w1 = _weight_norm(blk["v1"], blk["g1"])          # (c_out, c_prev, K)
        w2 = _weight_norm(blk["v2"], blk["g2"])          # (c_out, c_out,  K)

        def conv_mat(w, co, cop, ci, cip):
            # (co, ci, K) -> zero-padded (cop, K*cip); columns match the im2col
            # slab row order (tap-major, channel-minor).
            wp = jnp.zeros((cop, cip, K), w.dtype).at[:co, :ci, :].set(w)
            return jnp.transpose(wp, (0, 2, 1)).reshape(cop, K * cip).astype(
                jnp.bfloat16)

        def col(b, co, cop):
            return jnp.pad(b, (0, cop - co)).reshape(cop, 1).astype(jnp.float32)

        args += [conv_mat(w1, c_out, c_outp, c_prev, c_prevp),
                 col(blk["b1"], c_out, c_outp),
                 conv_mat(w2, c_out, c_outp, c_out, c_outp),
                 col(blk["b2"], c_out, c_outp)]
        in_specs += [pl.BlockSpec((c_outp, K * c_prevp), lambda i: (0, 0)),
                     pl.BlockSpec((c_outp, 1), lambda i: (0, 0)),
                     pl.BlockSpec((c_outp, K * c_outp), lambda i: (0, 0)),
                     pl.BlockSpec((c_outp, 1), lambda i: (0, 0))]
        if has_down:
            wd = jnp.zeros((c_outp, c_prevp), jnp.float32
                           ).at[:c_out, :c_prev].set(blk["wd"]).astype(jnp.bfloat16)
            args += [wd, col(blk["bd"], c_out, c_outp)]
            in_specs += [pl.BlockSpec((c_outp, c_prevp), lambda i: (0, 0)),
                         pl.BlockSpec((c_outp, 1), lambda i: (0, 0))]
        layer_cfgs.append((c_prevp, c_outp, d, p, has_down))
        c_prev, c_prevp = c_out, c_outp

    o_pad = _round_up(O, CPAD)
    wl = jnp.zeros((o_pad, c_prevp), jnp.float32
                   ).at[:O, :c_prev].set(params["lin_w"]).astype(jnp.bfloat16)
    bl = jnp.pad(params["lin_b"], (0, o_pad - O)).reshape(o_pad, 1
                                                          ).astype(jnp.float32)
    args += [wl, bl]
    in_specs += [pl.BlockSpec((o_pad, c_prevp), lambda i: (0, 0)),
                 pl.BlockSpec((o_pad, 1), lambda i: (0, 0))]

    c_maxp = max([c0p] + [cfg[1] for cfg in layer_cfgs])
    kernel = make_tcn_kernel(tuple(layer_cfgs), K, L, block_b, n_in=len(args))

    out = pl.pallas_call(
        kernel,
        out_shape=jax.ShapeDtypeStruct((B, o_pad, L), jnp.float32),
        grid_spec=pltpu.PrefetchScalarGridSpec(
            num_scalar_prefetch=0,
            grid=(B // block_b,),
            in_specs=in_specs,
            out_specs=pl.BlockSpec((block_b, o_pad, L), lambda i: (i, 0, 0)),
            scratch_shapes=[
                pltpu.VMEM((K * c_maxp, block_b * L), jnp.bfloat16)],  # im2col slab
        ),
        # No explicit vmem_limit_bytes: footprint is small and v7x only has
        # 64 MiB/TC, so the default scoped limit is the safe choice everywhere.
        compiler_params=pltpu.CompilerParams(
            dimension_semantics=("parallel",)),
    )(*args)

    return jnp.transpose(out[:, :O, :], (0, 2, 1))        # (B, L, O)


# ---------------------------- pure-JAX reference ----------------------------
@jax.jit
def reference_tcn(x, params):
    kernel_size = params["blocks"][0]["v1"].shape[-1]
    h = jnp.transpose(x, (0, 2, 1)).astype(jnp.bfloat16)

    def causal_conv(z, w, b, dilation, padding):
        y = lax.conv_general_dilated(
            z.astype(jnp.bfloat16), w.astype(jnp.bfloat16),
            window_strides=(1,), padding=[(padding, padding)],
            rhs_dilation=(dilation,),
            dimension_numbers=("NCH", "OIH", "NCH"),
            preferred_element_type=jnp.float32)
        if padding > 0:
            y = y[:, :, :-padding]                               # Chomp1d
        return y + b[None, :, None]

    for i, blk in enumerate(params["blocks"]):
        dilation = 2 ** i
        padding = (kernel_size - 1) * dilation
        w1 = _weight_norm(blk["v1"], blk["g1"])
        w2 = _weight_norm(blk["v2"], blk["g2"])
        u = _leaky(causal_conv(h, w1, blk["b1"], dilation, padding))
        u = _leaky(causal_conv(u, w2, blk["b2"], dilation, padding))
        if "wd" in blk:
            res = jnp.einsum("oc,bcl->bol", blk["wd"].astype(jnp.bfloat16), h,
                             preferred_element_type=jnp.float32)
            res = res + blk["bd"][None, :, None]
        else:
            res = h.astype(jnp.float32)
        h = _leaky(u + res).astype(jnp.bfloat16)

    y = jnp.einsum("oc,bcl->bol", params["lin_w"].astype(jnp.bfloat16), h,
                   preferred_element_type=jnp.float32)
    y = y + params["lin_b"][None, :, None]
    return jnp.transpose(y, (0, 2, 1))


if __name__ == "__main__":
    # Small TCN consistent with the module: TCN(input_size, output_size,
    # num_channels, kernel_size, dropout); channel_last input.
    input_size, output_size = 4, 5
    num_channels = [8, 8, 16]           # exercises identity AND 1x1 residuals
    kernel_size = 3
    B, L = 2, 16

    key = jax.random.PRNGKey(0)

    def normal(k, shape, scale=0.3):
        return scale * jax.random.normal(k, shape, jnp.float32)

    params = {"blocks": []}
    c_prev = input_size
    for c_out in num_channels:
        key, *ks = jax.random.split(key, 9)
        blk = {
            "v1": normal(ks[0], (c_out, c_prev, kernel_size)),
            "g1": 1.0 + 0.1 * jax.random.normal(ks[1], (c_out, 1, 1), jnp.float32),
            "b1": normal(ks[2], (c_out,), 0.1),
            "v2": normal(ks[3], (c_out, c_out, kernel_size)),
            "g2": 1.0 + 0.1 * jax.random.normal(ks[4], (c_out, 1, 1), jnp.float32),
            "b2": normal(ks[5], (c_out,), 0.1),
        }
        if c_prev != c_out:                 # downsample 1x1 conv exists
            blk["wd"] = normal(ks[6], (c_out, c_prev))
            blk["bd"] = normal(ks[7], (c_out,), 0.1)
        params["blocks"].append(blk)
        c_prev = c_out
    key, k_w, k_b, k_x = jax.random.split(key, 4)
    params["lin_w"] = normal(k_w, (output_size, c_prev))
    params["lin_b"] = normal(k_b, (output_size,), 0.1)

    x = jax.random.normal(k_x, (B, L, input_size), jnp.float32)  # channel_last

    out = jax.block_until_ready(tcn_forward(x, params))
    ref = jax.block_until_ready(reference_tcn(x, params))

    assert out.shape == (B, L, output_size), out.shape
    assert jnp.allclose(out, ref, atol=1e-3, rtol=1e-3), (
        f"max abs err {jnp.max(jnp.abs(out - ref))}")
    print("KERNEL_OK")
</pallas_src>

<mosaic_0001>
module attributes {stable_mosaic.version = 11 : i64} {
  func.func @kernel(%arg0: i32, %arg1: memref<1x16x16xbf16, #tpu.memory_space<vmem>>, %arg2: memref<16x48xbf16, #tpu.memory_space<vmem>>, %arg3: memref<16x1xf32, #tpu.memory_space<vmem>>, %arg4: memref<16x48xbf16, #tpu.memory_space<vmem>>, %arg5: memref<16x1xf32, #tpu.memory_space<vmem>>, %arg6: memref<16x16xbf16, #tpu.memory_space<vmem>>, %arg7: memref<16x1xf32, #tpu.memory_space<vmem>>, %arg8: memref<16x48xbf16, #tpu.memory_space<vmem>>, %arg9: memref<16x1xf32, #tpu.memory_space<vmem>>, %arg10: memref<16x48xbf16, #tpu.memory_space<vmem>>, %arg11: memref<16x1xf32, #tpu.memory_space<vmem>>, %arg12: memref<16x48xbf16, #tpu.memory_space<vmem>>, %arg13: memref<16x1xf32, #tpu.memory_space<vmem>>, %arg14: memref<16x48xbf16, #tpu.memory_space<vmem>>, %arg15: memref<16x1xf32, #tpu.memory_space<vmem>>, %arg16: memref<16x16xbf16, #tpu.memory_space<vmem>>, %arg17: memref<16x1xf32, #tpu.memory_space<vmem>>, %arg18: memref<16x16xbf16, #tpu.memory_space<vmem>>, %arg19: memref<16x1xf32, #tpu.memory_space<vmem>>, %arg20: memref<1x16x16xf32, #tpu.memory_space<vmem>>, %arg21: memref<48x16xbf16, #tpu.memory_space<vmem>>) attributes {dimension_semantics = [#tpu.dimension_semantics<parallel>], iteration_bounds = array<i64: 2>, scalar_prefetch = 0 : i64, scratch_operands = 1 : i64, tpu.core_type = #tpu.core_type<tc>, window_params = [{transform_indices = @transform_0, window_bounds = array<i64: 1, 16, 16>}, {pipeline_mode = #tpu.pipeline_mode<synchronous>, transform_indices = @transform_1, window_bounds = array<i64: 16, 48>}, {pipeline_mode = #tpu.pipeline_mode<synchronous>, transform_indices = @transform_2, window_bounds = array<i64: 16, 1>}, {pipeline_mode = #tpu.pipeline_mode<synchronous>, transform_indices = @transform_3, window_bounds = array<i64: 16, 48>}, {pipeline_mode = #tpu.pipeline_mode<synchronous>, transform_indices = @transform_4, window_bounds = array<i64: 16, 1>}, {pipeline_mode = #tpu.pipeline_mode<synchronous>, transform_indices = @transform_5, window_bounds = array<i64: 16, 16>}, {pipeline_mode = #tpu.pipeline_mode<synchronous>, transform_indices = @transform_6, window_bounds = array<i64: 16, 1>}, {pipeline_mode = #tpu.pipeline_mode<synchronous>, transform_indices = @transform_7, window_bounds = array<i64: 16, 48>}, {pipeline_mode = #tpu.pipeline_mode<synchronous>, transform_indices = @transform_8, window_bounds = array<i64: 16, 1>}, {pipeline_mode = #tpu.pipeline_mode<synchronous>, transform_indices = @transform_9, window_bounds = array<i64: 16, 48>}, {pipeline_mode = #tpu.pipeline_mode<synchronous>, transform_indices = @transform_10, window_bounds = array<i64: 16, 1>}, {pipeline_mode = #tpu.pipeline_mode<synchronous>, transform_indices = @transform_11, window_bounds = array<i64: 16, 48>}, {pipeline_mode = #tpu.pipeline_mode<synchronous>, transform_indices = @transform_12, window_bounds = array<i64: 16, 1>}, {pipeline_mode = #tpu.pipeline_mode<synchronous>, transform_indices = @transform_13, window_bounds = array<i64: 16, 48>}, {pipeline_mode = #tpu.pipeline_mode<synchronous>, transform_indices = @transform_14, window_bounds = array<i64: 16, 1>}, {pipeline_mode = #tpu.pipeline_mode<synchronous>, transform_indices = @transform_15, window_bounds = array<i64: 16, 16>}, {pipeline_mode = #tpu.pipeline_mode<synchronous>, transform_indices = @transform_16, window_bounds = array<i64: 16, 1>}, {pipeline_mode = #tpu.pipeline_mode<synchronous>, transform_indices = @transform_17, window_bounds = array<i64: 16, 16>}, {pipeline_mode = #tpu.pipeline_mode<synchronous>, transform_indices = @transform_18, window_bounds = array<i64: 16, 1>}, {transform_indices = @transform_19, window_bounds = array<i64: 1, 16, 16>}]} {
    %c0 = arith.constant 0 : index
    %c0_0 = arith.constant 0 : index
    %c0_1 = arith.constant 0 : index
    %0 = vector.load %arg1[%c0, %c0_0, %c0_1] : memref<1x16x16xbf16, #tpu.memory_space<vmem>>, vector<1x16x16xbf16>
    %1 = vector.shape_cast %0 : vector<1x16x16xbf16> to vector<16x16xbf16>
    %cst = arith.constant 0.000000e+00 : bf16
    %2 = vector.broadcast %cst : bf16 to vector<16x2xbf16>
    %c0_2 = arith.constant 0 : index
    %c0_3 = arith.constant 0 : index
    %3 = vector.load %arg21[%c0_2, %c0_3] : memref<48x16xbf16, #tpu.memory_space<vmem>>, vector<16x2xbf16>
    tpu.vector_store %arg21[%c0_2, %c0_3], %2 {strides = array<i32>} : memref<48x16xbf16, #tpu.memory_space<vmem>>, vector<16x2xbf16>,
    %4 = vector.extract_strided_slice %1 {offsets = [0, 0], sizes = [16, 14], strides = [1, 1]} : vector<16x16xbf16> to vector<16x14xbf16>
    %c0_4 = arith.constant 0 : index
    %c2 = arith.constant 2 : index
    %5 = vector.load %arg21[%c0_4, %c2] : memref<48x16xbf16, #tpu.memory_space<vmem>>, vector<16x14xbf16>
    tpu.vector_store %arg21[%c0_4, %c2], %4 {strides = array<i32>} : memref<48x16xbf16, #tpu.memory_space<vmem>>, vector<16x14xbf16>,
    %cst_5 = arith.constant 0.000000e+00 : bf16
    %6 = vector.broadcast %cst_5 : bf16 to vector<16x1xbf16>
    %c16 = arith.constant 16 : index
    %c0_6 = arith.constant 0 : index
    %7 = vector.load %arg21[%c16, %c0_6] : memref<48x16xbf16, #tpu.memory_space<vmem>>, vector<16x1xbf16>
    tpu.vector_store %arg21[%c16, %c0_6], %6 {strides = array<i32>} : memref<48x16xbf16, #tpu.memory_space<vmem>>, vector<16x1xbf16>,
    %8 = vector.extract_strided_slice %1 {offsets = [0, 0], sizes = [16, 15], strides = [1, 1]} : vector<16x16xbf16> to vector<16x15xbf16>
    %c16_7 = arith.constant 16 : index
    %c1 = arith.constant 1 : index
    %9 = vector.load %arg21[%c16_7, %c1] : memref<48x16xbf16, #tpu.memory_space<vmem>>, vector<16x15xbf16>
    tpu.vector_store %arg21[%c16_7, %c1], %8 {strides = array<i32>} : memref<48x16xbf16, #tpu.memory_space<vmem>>, vector<16x15xbf16>,
    %c32 = arith.constant 32 : index
    %c0_8 = arith.constant 0 : index
    %10 = vector.load %arg21[%c32, %c0_8] : memref<48x16xbf16, #tpu.memory_space<vmem>>, vector<16x16xbf16>
    tpu.vector_store %arg21[%c32, %c0_8], %1 {strides = array<i32>} : memref<48x16xbf16, #tpu.memory_space<vmem>>, vector<16x16xbf16>,
    %c0_9 = arith.constant 0 : index
    %c0_10 = arith.constant 0 : index
    %11 = vector.load %arg2[%c0_9, %c0_10] : memref<16x48xbf16, #tpu.memory_space<vmem>>, vector<16x48xbf16>
    %c0_11 = arith.constant 0 : index
    %c0_12 = arith.constant 0 : index
    %12 = vector.load %arg21[%c0_11, %c0_12] : memref<48x16xbf16, #tpu.memory_space<vmem>>, vector<48x16xbf16>
    %cst_13 = arith.constant dense<0.000000e+00> : vector<16x16xf32>
    %13 = tpu.matmul %11, %12, %cst_13 {dimension_numbers = #tpu.dot_dimension_numbers<[1], [0], [0], [1], [0, 0, 1, 1], [], []>} : vector<16x48xbf16>, vector<48x16xbf16>, vector<16x16xf32> -> vector<16x16xf32>
    %c0_14 = arith.constant 0 : index
    %c0_15 = arith.constant 0 : index
    %14 = vector.load %arg3[%c0_14, %c0_15] : memref<16x1xf32, #tpu.memory_space<vmem>>, vector<16x1xf32>
    %15 = vector.broadcast %14 : vector<16x1xf32> to vector<16x16xf32>
    %16 = arith.addf %13, %15 : vector<16x16xf32>
    %cst_16 = arith.constant 0.000000e+00 : f32
    %17 = vector.broadcast %cst_16 : f32 to vector<16x16xf32>
    %18 = arith.cmpf oge, %16, %17 : vector<16x16xf32>
    %cst_17 = arith.constant 1.000000e-01 : f32
    %19 = vector.broadcast %cst_17 : f32 to vector<16x16xf32>
    %20 = arith.mulf %19, %16 : vector<16x16xf32>
    %21 = arith.select %18, %16, %20 : vector<16x16xi1>, vector<16x16xf32>
    %22 = arith.truncf %21 : vector<16x16xf32> to vector<16x16xbf16>
    %cst_18 = arith.constant 0.000000e+00 : bf16
    %23 = vector.broadcast %cst_18 : bf16 to vector<16x2xbf16>
    %c0_19 = arith.constant 0 : index
    %c0_20 = arith.constant 0 : index
    %24 = vector.load %arg21[%c0_19, %c0_20] : memref<48x16xbf16, #tpu.memory_space<vmem>>, vector<16x2xbf16>
    tpu.vector_store %arg21[%c0_19, %c0_20], %23 {strides = array<i32>} : memref<48x16xbf16, #tpu.memory_space<vmem>>, vector<16x2xbf16>,
    %25 = vector.extract_strided_slice %22 {offsets = [0, 0], sizes = [16, 14], strides = [1, 1]} : vector<16x16xbf16> to vector<16x14xbf16>
    %c0_21 = arith.constant 0 : index
    %c2_22 = arith.constant 2 : index
    %26 = vector.load %arg21[%c0_21, %c2_22] : memref<48x16xbf16, #tpu.memory_space<vmem>>, vector<16x14xbf16>
    tpu.vector_store %arg21[%c0_21, %c2_22], %25 {strides = array<i32>} : memref<48x16xbf16, #tpu.memory_space<vmem>>, vector<16x14xbf16>,
    %cst_23 = arith.constant 0.000000e+00 : bf16
    %27 = vector.broadcast %cst_23 : bf16 to vector<16x1xbf16>
    %c16_24 = arith.constant 16 : index
    %c0_25 = arith.constant 0 : index
    %28 = vector.load %arg21[%c16_24, %c0_25] : memref<48x16xbf16, #tpu.memory_space<vmem>>, vector<16x1xbf16>
    tpu.vector_store %arg21[%c16_24, %c0_25], %27 {strides = array<i32>} : memref<48x16xbf16, #tpu.memory_space<vmem>>, vector<16x1xbf16>,
    %29 = vector.extract_strided_slice %22 {offsets = [0, 0], sizes = [16, 15], strides = [1, 1]} : vector<16x16xbf16> to vector<16x15xbf16>
    %c16_26 = arith.constant 16 : index
    %c1_27 = arith.constant 1 : index
    %30 = vector.load %arg21[%c16_26, %c1_27] : memref<48x16xbf16, #tpu.memory_space<vmem>>, vector<16x15xbf16>
    tpu.vector_store %arg21[%c16_26, %c1_27], %29 {strides = array<i32>} : memref<48x16xbf16, #tpu.memory_space<vmem>>, vector<16x15xbf16>,
    %c32_28 = arith.constant 32 : index
    %c0_29 = arith.constant 0 : index
    %31 = vector.load %arg21[%c32_28, %c0_29] : memref<48x16xbf16, #tpu.memory_space<vmem>>, vector<16x16xbf16>
    tpu.vector_store %arg21[%c32_28, %c0_29], %22 {strides = array<i32>} : memref<48x16xbf16, #tpu.memory_space<vmem>>, vector<16x16xbf16>,
    %c0_30 = arith.constant 0 : index
    %c0_31 = arith.constant 0 : index
    %32 = vector.load %arg4[%c0_30, %c0_31] : memref<16x48xbf16, #tpu.memory_space<vmem>>, vector<16x48xbf16>
    %c0_32 = arith.constant 0 : index
    %c0_33 = arith.constant 0 : index
    %33 = vector.load %arg21[%c0_32, %c0_33] : memref<48x16xbf16, #tpu.memory_space<vmem>>, vector<48x16xbf16>
    %cst_34 = arith.constant dense<0.000000e+00> : vector<16x16xf32>
    %34 = tpu.matmul %32, %33, %cst_34 {dimension_numbers = #tpu.dot_dimension_numbers<[1], [0], [0], [1], [0, 0, 1, 1], [], []>} : vector<16x48xbf16>, vector<48x16xbf16>, vector<16x16xf32> -> vector<16x16xf32>
    %c0_35 = arith.constant 0 : index
    %c0_36 = arith.constant 0 : index
    %35 = vector.load %arg5[%c0_35, %c0_36] : memref<16x1xf32, #tpu.memory_space<vmem>>, vector<16x1xf32>
    %36 = vector.broadcast %35 : vector<16x1xf32> to vector<16x16xf32>
    %37 = arith.addf %34, %36 : vector<16x16xf32>
    %cst_37 = arith.constant 0.000000e+00 : f32
    %38 = vector.broadcast %cst_37 : f32 to vector<16x16xf32>
    %39 = arith.cmpf oge, %37, %38 : vector<16x16xf32>
    %cst_38 = arith.constant 1.000000e-01 : f32
    %40 = vector.broadcast %cst_38 : f32 to vector<16x16xf32>
    %41 = arith.mulf %40, %37 : vector<16x16xf32>
    %42 = arith.select %39, %37, %41 : vector<16x16xi1>, vector<16x16xf32>
    %c0_39 = arith.constant 0 : index
    %c0_40 = arith.constant 0 : index
    %43 = vector.load %arg6[%c0_39, %c0_40] : memref<16x16xbf16, #tpu.memory_space<vmem>>, vector<16x16xbf16>
    %cst_41 = arith.constant dense<0.000000e+00> : vector<16x16xf32>
    %44 = tpu.matmul %43, %1, %cst_41 {dimension_numbers = #tpu.dot_dimension_numbers<[1], [0], [0], [1], [0, 0, 1, 1], [], []>} : vector<16x16xbf16>, vector<16x16xbf16>, vector<16x16xf32> -> vector<16x16xf32>
    %c0_42 = arith.constant 0 : index
    %c0_43 = arith.constant 0 : index
    %45 = vector.load %arg7[%c0_42, %c0_43] : memref<16x1xf32, #tpu.memory_space<vmem>>, vector<16x1xf32>
    %46 = vector.broadcast %45 : vector<16x1xf32> to vector<16x16xf32>
    %47 = arith.addf %44, %46 : vector<16x16xf32>
    %48 = arith.addf %42, %47 : vector<16x16xf32>
    %cst_44 = arith.constant 0.000000e+00 : f32
    %49 = vector.broadcast %cst_44 : f32 to vector<16x16xf32>
    %50 = arith.cmpf oge, %48, %49 : vector<16x16xf32>
    %cst_45 = arith.constant 1.000000e-01 : f32
    %51 = vector.broadcast %cst_45 : f32 to vector<16x16xf32>
    %52 = arith.mulf %51, %48 : vector<16x16xf32>
    %53 = arith.select %50, %48, %52 : vector<16x16xi1>, vector<16x16xf32>
    %54 = arith.truncf %53 : vector<16x16xf32> to vector<16x16xbf16>
    %cst_46 = arith.constant 0.000000e+00 : bf16
    %55 = vector.broadcast %cst_46 : bf16 to vector<16x4xbf16>
    %c0_47 = arith.constant 0 : index
    %c0_48 = arith.constant 0 : index
    %56 = vector.load %arg21[%c0_47, %c0_48] : memref<48x16xbf16, #tpu.memory_space<vmem>>, vector<16x4xbf16>
    tpu.vector_store %arg21[%c0_47, %c0_48], %55 {strides = array<i32>} : memref<48x16xbf16, #tpu.memory_space<vmem>>, vector<16x4xbf16>,
    %57 = vector.extract_strided_slice %54 {offsets = [0, 0], sizes = [16, 12], strides = [1, 1]} : vector<16x16xbf16> to vector<16x12xbf16>
    %c0_49 = arith.constant 0 : index
    %c4 = arith.constant 4 : index
    %58 = vector.load %arg21[%c0_49, %c4] : memref<48x16xbf16, #tpu.memory_space<vmem>>, vector<16x12xbf16>
    tpu.vector_store %arg21[%c0_49, %c4], %57 {strides = array<i32>} : memref<48x16xbf16, #tpu.memory_space<vmem>>, vector<16x12xbf16>,
    %cst_50 = arith.constant 0.000000e+00 : bf16
    %59 = vector.broadcast %cst_50 : bf16 to vector<16x2xbf16>
    %c16_51 = arith.constant 16 : index
    %c0_52 = arith.constant 0 : index
    %60 = vector.load %arg21[%c16_51, %c0_52] : memref<48x16xbf16, #tpu.memory_space<vmem>>, vector<16x2xbf16>
    tpu.vector_store %arg21[%c16_51, %c0_52], %59 {strides = array<i32>} : memref<48x16xbf16, #tpu.memory_space<vmem>>, vector<16x2xbf16>,
    %61 = vector.extract_strided_slice %54 {offsets = [0, 0], sizes = [16, 14], strides = [1, 1]} : vector<16x16xbf16> to vector<16x14xbf16>
    %c16_53 = arith.constant 16 : index
    %c2_54 = arith.constant 2 : index
    %62 = vector.load %arg21[%c16_53, %c2_54] : memref<48x16xbf16, #tpu.memory_space<vmem>>, vector<16x14xbf16>
    tpu.vector_store %arg21[%c16_53, %c2_54], %61 {strides = array<i32>} : memref<48x16xbf16, #tpu.memory_space<vmem>>, vector<16x14xbf16>,
    %c32_55 = arith.constant 32 : index
    %c0_56 = arith.constant 0 : index
    %63 = vector.load %arg21[%c32_55, %c0_56] : memref<48x16xbf16, #tpu.memory_space<vmem>>, vector<16x16xbf16>
    tpu.vector_store %arg21[%c32_55, %c0_56], %54 {strides = array<i32>} : memref<48x16xbf16, #tpu.memory_space<vmem>>, vector<16x16xbf16>,
    %c0_57 = arith.constant 0 : index
    %c0_58 = arith.constant 0 : index
    %64 = vector.load %arg8[%c0_57, %c0_58] : memref<16x48xbf16, #tpu.memory_space<vmem>>, vector<16x48xbf16>
    %c0_59 = arith.constant 0 : index
    %c0_60 = arith.constant 0 : index
    %65 = vector.load %arg21[%c0_59, %c0_60] : memref<48x16xbf16, #tpu.memory_space<vmem>>, vector<48x16xbf16>
    %cst_61 = arith.constant dense<0.000000e+00> : vector<16x16xf32>
    %66 = tpu.matmul %64, %65, %cst_61 {dimension_numbers = #tpu.dot_dimension_numbers<[1], [0], [0], [1], [0, 0, 1, 1], [], []>} : vector<16x48xbf16>, vector<48x16xbf16>, vector<16x16xf32> -> vector<16x16xf32>
    %c0_62 = arith.constant 0 : index
    %c0_63 = arith.constant 0 : index
    %67 = vector.load %arg9[%c0_62, %c0_63] : memref<16x1xf32, #tpu.memory_space<vmem>>, vector<16x1xf32>
    %68 = vector.broadcast %67 : vector<16x1xf32> to vector<16x16xf32>
    %69 = arith.addf %66, %68 : vector<16x16xf32>
    %cst_64 = arith.constant 0.000000e+00 : f32
    %70 = vector.broadcast %cst_64 : f32 to vector<16x16xf32>
    %71 = arith.cmpf oge, %69, %70 : vector<16x16xf32>
    %cst_65 = arith.constant 1.000000e-01 : f32
    %72 = vector.broadcast %cst_65 : f32 to vector<16x16xf32>
    %73 = arith.mulf %72, %69 : vector<16x16xf32>
    %74 = arith.select %71, %69, %73 : vector<16x16xi1>, vector<16x16xf32>
    %75 = arith.truncf %74 : vector<16x16xf32> to vector<16x16xbf16>
    %cst_66 = arith.constant 0.000000e+00 : bf16
    %76 = vector.broadcast %cst_66 : bf16 to vector<16x4xbf16>
    %c0_67 = arith.constant 0 : index
    %c0_68 = arith.constant 0 : index
    %77 = vector.load %arg21[%c0_67, %c0_68] : memref<48x16xbf16, #tpu.memory_space<vmem>>, vector<16x4xbf16>
    tpu.vector_store %arg21[%c0_67, %c0_68], %76 {strides = array<i32>} : memref<48x16xbf16, #tpu.memory_space<vmem>>, vector<16x4xbf16>,
    %78 = vector.extract_strided_slice %75 {offsets = [0, 0], sizes = [16, 12], strides = [1, 1]} : vector<16x16xbf16> to vector<16x12xbf16>
    %c0_69 = arith.constant 0 : index
    %c4_70 = arith.constant 4 : index
    %79 = vector.load %arg21[%c0_69, %c4_70] : memref<48x16xbf16, #tpu.memory_space<vmem>>, vector<16x12xbf16>
    tpu.vector_store %arg21[%c0_69, %c4_70], %78 {strides = array<i32>} : memref<48x16xbf16, #tpu.memory_space<vmem>>, vector<16x12xbf16>,
    %cst_71 = arith.constant 0.000000e+00 : bf16
    %80 = vector.broadcast %cst_71 : bf16 to vector<16x2xbf16>
    %c16_72 = arith.constant 16 : index
    %c0_73 = arith.constant 0 : index
    %81 = vector.load %arg21[%c16_72, %c0_73] : memref<48x16xbf16, #tpu.memory_space<vmem>>, vector<16x2xbf16>
    tpu.vector_store %arg21[%c16_72, %c0_73], %80 {strides = array<i32>} : memref<48x16xbf16, #tpu.memory_space<vmem>>, vector<16x2xbf16>,
    %82 = vector.extract_strided_slice %75 {offsets = [0, 0], sizes = [16, 14], strides = [1, 1]} : vector<16x16xbf16> to vector<16x14xbf16>
    %c16_74 = arith.constant 16 : index
    %c2_75 = arith.constant 2 : index
    %83 = vector.load %arg21[%c16_74, %c2_75] : memref<48x16xbf16, #tpu.memory_space<vmem>>, vector<16x14xbf16>
    tpu.vector_store %arg21[%c16_74, %c2_75], %82 {strides = array<i32>} : memref<48x16xbf16, #tpu.memory_space<vmem>>, vector<16x14xbf16>,
    %c32_76 = arith.constant 32 : index
    %c0_77 = arith.constant 0 : index
    %84 = vector.load %arg21[%c32_76, %c0_77] : memref<48x16xbf16, #tpu.memory_space<vmem>>, vector<16x16xbf16>
    tpu.vector_store %arg21[%c32_76, %c0_77], %75 {strides = array<i32>} : memref<48x16xbf16, #tpu.memory_space<vmem>>, vector<16x16xbf16>,
    %c0_78 = arith.constant 0 : index
    %c0_79 = arith.constant 0 : index
    %85 = vector.load %arg10[%c0_78, %c0_79] : memref<16x48xbf16, #tpu.memory_space<vmem>>, vector<16x48xbf16>
    %c0_80 = arith.constant 0 : index
    %c0_81 = arith.constant 0 : index
    %86 = vector.load %arg21[%c0_80, %c0_81] : memref<48x16xbf16, #tpu.memory_space<vmem>>, vector<48x16xbf16>
    %cst_82 = arith.constant dense<0.000000e+00> : vector<16x16xf32>
    %87 = tpu.matmul %85, %86, %cst_82 {dimension_numbers = #tpu.dot_dimension_numbers<[1], [0], [0], [1], [0, 0, 1, 1], [], []>} : vector<16x48xbf16>, vector<48x16xbf16>, vector<16x16xf32> -> vector<16x16xf32>
    %c0_83 = arith.constant 0 : index
    %c0_84 = arith.constant 0 : index
    %88 = vector.load %arg11[%c0_83, %c0_84] : memref<16x1xf32, #tpu.memory_space<vmem>>, vector<16x1xf32>
    %89 = vector.broadcast %88 : vector<16x1xf32> to vector<16x16xf32>
    %90 = arith.addf %87, %89 : vector<16x16xf32>
    %cst_85 = arith.constant 0.000000e+00 : f32
    %91 = vector.broadcast %cst_85 : f32 to vector<16x16xf32>
    %92 = arith.cmpf oge, %90, %91 : vector<16x16xf32>
    %cst_86 = arith.constant 1.000000e-01 : f32
    %93 = vector.broadcast %cst_86 : f32 to vector<16x16xf32>
    %94 = arith.mulf %93, %90 : vector<16x16xf32>
    %95 = arith.select %92, %90, %94 : vector<16x16xi1>, vector<16x16xf32>
    %96 = arith.extf %54 : vector<16x16xbf16> to vector<16x16xf32>
    %97 = arith.addf %95, %96 : vector<16x16xf32>
    %cst_87 = arith.constant 0.000000e+00 : f32
    %98 = vector.broadcast %cst_87 : f32 to vector<16x16xf32>
    %99 = arith.cmpf oge, %97, %98 : vector<16x16xf32>
    %cst_88 = arith.constant 1.000000e-01 : f32
    %100 = vector.broadcast %cst_88 : f32 to vector<16x16xf32>
    %101 = arith.mulf %100, %97 : vector<16x16xf32>
    %102 = arith.select %99, %97, %101 : vector<16x16xi1>, vector<16x16xf32>
    %103 = arith.truncf %102 : vector<16x16xf32> to vector<16x16xbf16>
    %cst_89 = arith.constant 0.000000e+00 : bf16
    %104 = vector.broadcast %cst_89 : bf16 to vector<16x8xbf16>
    %c0_90 = arith.constant 0 : index
    %c0_91 = arith.constant 0 : index
    %105 = vector.load %arg21[%c0_90, %c0_91] : memref<48x16xbf16, #tpu.memory_space<vmem>>, vector<16x8xbf16>
    tpu.vector_store %arg21[%c0_90, %c0_91], %104 {strides = array<i32>} : memref<48x16xbf16, #tpu.memory_space<vmem>>, vector<16x8xbf16>,
    %106 = vector.extract_strided_slice %103 {offsets = [0, 0], sizes = [16, 8], strides = [1, 1]} : vector<16x16xbf16> to vector<16x8xbf16>
    %c0_92 = arith.constant 0 : index
    %c8 = arith.constant 8 : index
    %107 = vector.load %arg21[%c0_92, %c8] : memref<48x16xbf16, #tpu.memory_space<vmem>>, vector<16x8xbf16>
    tpu.vector_store %arg21[%c0_92, %c8], %106 {strides = array<i32>} : memref<48x16xbf16, #tpu.memory_space<vmem>>, vector<16x8xbf16>,
    %cst_93 = arith.constant 0.000000e+00 : bf16
    %108 = vector.broadcast %cst_93 : bf16 to vector<16x4xbf16>
    %c16_94 = arith.constant 16 : index
    %c0_95 = arith.constant 0 : index
    %109 = vector.load %arg21[%c16_94, %c0_95] : memref<48x16xbf16, #tpu.memory_space<vmem>>, vector<16x4xbf16>
    tpu.vector_store %arg21[%c16_94, %c0_95], %108 {strides = array<i32>} : memref<48x16xbf16, #tpu.memory_space<vmem>>, vector<16x4xbf16>,
    %110 = vector.extract_strided_slice %103 {offsets = [0, 0], sizes = [16, 12], strides = [1, 1]} : vector<16x16xbf16> to vector<16x12xbf16>
    %c16_96 = arith.constant 16 : index
    %c4_97 = arith.constant 4 : index
    %111 = vector.load %arg21[%c16_96, %c4_97] : memref<48x16xbf16, #tpu.memory_space<vmem>>, vector<16x12xbf16>
    tpu.vector_store %arg21[%c16_96, %c4_97], %110 {strides = array<i32>} : memref<48x16xbf16, #tpu.memory_space<vmem>>, vector<16x12xbf16>,
    %c32_98 = arith.constant 32 : index
    %c0_99 = arith.constant 0 : index
    %112 = vector.load %arg21[%c32_98, %c0_99] : memref<48x16xbf16, #tpu.memory_space<vmem>>, vector<16x16xbf16>
    tpu.vector_store %arg21[%c32_98, %c0_99], %103 {strides = array<i32>} : memref<48x16xbf16, #tpu.memory_space<vmem>>, vector<16x16xbf16>,
    %c0_100 = arith.constant 0 : index
    %c0_101 = arith.constant 0 : index
    %113 = vector.load %arg12[%c0_100, %c0_101] : memref<16x48xbf16, #tpu.memory_space<vmem>>, vector<16x48xbf16>
    %c0_102 = arith.constant 0 : index
    %c0_103 = arith.constant 0 : index
    %114 = vector.load %arg21[%c0_102, %c0_103] : memref<48x16xbf16, #tpu.memory_space<vmem>>, vector<48x16xbf16>
    %cst_104 = arith.constant dense<0.000000e+00> : vector<16x16xf32>
    %115 = tpu.matmul %113, %114, %cst_104 {dimension_numbers = #tpu.dot_dimension_numbers<[1], [0], [0], [1], [0, 0, 1, 1], [], []>} : vector<16x48xbf16>, vector<48x16xbf16>, vector<16x16xf32> -> vector<16x16xf32>
    %c0_105 = arith.constant 0 : index
    %c0_106 = arith.constant 0 : index
    %116 = vector.load %arg13[%c0_105, %c0_106] : memref<16x1xf32, #tpu.memory_space<vmem>>, vector<16x1xf32>
    %117 = vector.broadcast %116 : vector<16x1xf32> to vector<16x16xf32>
    %118 = arith.addf %115, %117 : vector<16x16xf32>
    %cst_107 = arith.constant 0.000000e+00 : f32
    %119 = vector.broadcast %cst_107 : f32 to vector<16x16xf32>
    %120 = arith.cmpf oge, %118, %119 : vector<16x16xf32>
    %cst_108 = arith.constant 1.000000e-01 : f32
    %121 = vector.broadcast %cst_108 : f32 to vector<16x16xf32>
    %122 = arith.mulf %121, %118 : vector<16x16xf32>
    %123 = arith.select %120, %118, %122 : vector<16x16xi1>, vector<16x16xf32>
    %124 = arith.truncf %123 : vector<16x16xf32> to vector<16x16xbf16>
    %cst_109 = arith.constant 0.000000e+00 : bf16
    %125 = vector.broadcast %cst_109 : bf16 to vector<16x8xbf16>
    %c0_110 = arith.constant 0 : index
    %c0_111 = arith.constant 0 : index
    %126 = vector.load %arg21[%c0_110, %c0_111] : memref<48x16xbf16, #tpu.memory_space<vmem>>, vector<16x8xbf16>
    tpu.vector_store %arg21[%c0_110, %c0_111], %125 {strides = array<i32>} : memref<48x16xbf16, #tpu.memory_space<vmem>>, vector<16x8xbf16>,
    %127 = vector.extract_strided_slice %124 {offsets = [0, 0], sizes = [16, 8], strides = [1, 1]} : vector<16x16xbf16> to vector<16x8xbf16>
    %c0_112 = arith.constant 0 : index
    %c8_113 = arith.constant 8 : index
    %128 = vector.load %arg21[%c0_112, %c8_113] : memref<48x16xbf16, #tpu.memory_space<vmem>>, vector<16x8xbf16>
    tpu.vector_store %arg21[%c0_112, %c8_113], %127 {strides = array<i32>} : memref<48x16xbf16, #tpu.memory_space<vmem>>, vector<16x8xbf16>,
    %cst_114 = arith.constant 0.000000e+00 : bf16
    %129 = vector.broadcast %cst_114 : bf16 to vector<16x4xbf16>
    %c16_115 = arith.constant 16 : index
    %c0_116 = arith.constant 0 : index
    %130 = vector.load %arg21[%c16_115, %c0_116] : memref<48x16xbf16, #tpu.memory_space<vmem>>, vector<16x4xbf16>
    tpu.vector_store %arg21[%c16_115, %c0_116], %129 {strides = array<i32>} : memref<48x16xbf16, #tpu.memory_space<vmem>>, vector<16x4xbf16>,
    %131 = vector.extract_strided_slice %124 {offsets = [0, 0], sizes = [16, 12], strides = [1, 1]} : vector<16x16xbf16> to vector<16x12xbf16>
    %c16_117 = arith.constant 16 : index
    %c4_118 = arith.constant 4 : index
    %132 = vector.load %arg21[%c16_117, %c4_118] : memref<48x16xbf16, #tpu.memory_space<vmem>>, vector<16x12xbf16>
    tpu.vector_store %arg21[%c16_117, %c4_118], %131 {strides = array<i32>} : memref<48x16xbf16, #tpu.memory_space<vmem>>, vector<16x12xbf16>,
    %c32_119 = arith.constant 32 : index
    %c0_120 = arith.constant 0 : index
    %133 = vector.load %arg21[%c32_119, %c0_120] : memref<48x16xbf16, #tpu.memory_space<vmem>>, vector<16x16xbf16>
    tpu.vector_store %arg21[%c32_119, %c0_120], %124 {strides = array<i32>} : memref<48x16xbf16, #tpu.memory_space<vmem>>, vector<16x16xbf16>,
    %c0_121 = arith.constant 0 : index
    %c0_122 = arith.constant 0 : index
    %134 = vector.load %arg14[%c0_121, %c0_122] : memref<16x48xbf16, #tpu.memory_space<vmem>>, vector<16x48xbf16>
    %c0_123 = arith.constant 0 : index
    %c0_124 = arith.constant 0 : index
    %135 = vector.load %arg21[%c0_123, %c0_124] : memref<48x16xbf16, #tpu.memory_space<vmem>>, vector<48x16xbf16>
    %cst_125 = arith.constant dense<0.000000e+00> : vector<16x16xf32>
    %136 = tpu.matmul %134, %135, %cst_125 {dimension_numbers = #tpu.dot_dimension_numbers<[1], [0], [0], [1], [0, 0, 1, 1], [], []>} : vector<16x48xbf16>, vector<48x16xbf16>, vector<16x16xf32> -> vector<16x16xf32>
    %c0_126 = arith.constant 0 : index
    %c0_127 = arith.constant 0 : index
    %137 = vector.load %arg15[%c0_126, %c0_127] : memref<16x1xf32, #tpu.memory_space<vmem>>, vector<16x1xf32>
    %138 = vector.broadcast %137 : vector<16x1xf32> to vector<16x16xf32>
    %139 = arith.addf %136, %138 : vector<16x16xf32>
    %cst_128 = arith.constant 0.000000e+00 : f32
    %140 = vector.broadcast %cst_128 : f32 to vector<16x16xf32>
    %141 = arith.cmpf oge, %139, %140 : vector<16x16xf32>
    %cst_129 = arith.constant 1.000000e-01 : f32
    %142 = vector.broadcast %cst_129 : f32 to vector<16x16xf32>
    %143 = arith.mulf %142, %139 : vector<16x16xf32>
    %144 = arith.select %141, %139, %143 : vector<16x16xi1>, vector<16x16xf32>
    %c0_130 = arith.constant 0 : index
    %c0_131 = arith.constant 0 : index
    %145 = vector.load %arg16[%c0_130, %c0_131] : memref<16x16xbf16, #tpu.memory_space<vmem>>, vector<16x16xbf16>
    %cst_132 = arith.constant dense<0.000000e+00> : vector<16x16xf32>
    %146 = tpu.matmul %145, %103, %cst_132 {dimension_numbers = #tpu.dot_dimension_numbers<[1], [0], [0], [1], [0, 0, 1, 1], [], []>} : vector<16x16xbf16>, vector<16x16xbf16>, vector<16x16xf32> -> vector<16x16xf32>
    %c0_133 = arith.constant 0 : index
    %c0_134 = arith.constant 0 : index
    %147 = vector.load %arg17[%c0_133, %c0_134] : memref<16x1xf32, #tpu.memory_space<vmem>>, vector<16x1xf32>
    %148 = vector.broadcast %147 : vector<16x1xf32> to vector<16x16xf32>
    %149 = arith.addf %146, %148 : vector<16x16xf32>
    %150 = arith.addf %144, %149 : vector<16x16xf32>
    %cst_135 = arith.constant 0.000000e+00 : f32
    %151 = vector.broadcast %cst_135 : f32 to vector<16x16xf32>
    %152 = arith.cmpf oge, %150, %151 : vector<16x16xf32>
    %cst_136 = arith.constant 1.000000e-01 : f32
    %153 = vector.broadcast %cst_136 : f32 to vector<16x16xf32>
    %154 = arith.mulf %153, %150 : vector<16x16xf32>
    %155 = arith.select %152, %150, %154 : vector<16x16xi1>, vector<16x16xf32>
    %156 = arith.truncf %155 : vector<16x16xf32> to vector<16x16xbf16>
    %c0_137 = arith.constant 0 : index
    %c0_138 = arith.constant 0 : index
    %157 = vector.load %arg18[%c0_137, %c0_138] : memref<16x16xbf16, #tpu.memory_space<vmem>>, vector<16x16xbf16>
    %cst_139 = arith.constant dense<0.000000e+00> : vector<16x16xf32>
    %158 = tpu.matmul %157, %156, %cst_139 {dimension_numbers = #tpu.dot_dimension_numbers<[1], [0], [0], [1], [0, 0, 1, 1], [], []>} : vector<16x16xbf16>, vector<16x16xbf16>, vector<16x16xf32> -> vector<16x16xf32>
    %c0_140 = arith.constant 0 : index
    %c0_141 = arith.constant 0 : index
    %159 = vector.load %arg19[%c0_140, %c0_141] : memref<16x1xf32, #tpu.memory_space<vmem>>, vector<16x1xf32>
    %160 = vector.broadcast %159 : vector<16x1xf32> to vector<16x16xf32>
    %161 = arith.addf %158, %160 : vector<16x16xf32>
    %c0_142 = arith.constant 0 : index
    %c0_143 = arith.constant 0 : index
    %c0_144 = arith.constant 0 : index
    %162 = vector.load %arg20[%c0_142, %c0_143, %c0_144] : memref<1x16x16xf32, #tpu.memory_space<vmem>>, vector<1x16x16xf32>
    %163 = vector.shape_cast %162 : vector<1x16x16xf32> to vector<16x16xf32>
    %164 = vector.shape_cast %161 : vector<16x16xf32> to vector<1x16x16xf32>
    tpu.vector_store %arg20[%c0_142, %c0_143, %c0_144], %164 {strides = array<i32>} : memref<1x16x16xf32, #tpu.memory_space<vmem>>, vector<1x16x16xf32>,
    return
  }
  func.func @transform_0(%arg0: i32) -> (i32, i32, i32) {
    %c0_i32 = arith.constant 0 : i32
    %c0_i32_0 = arith.constant 0 : i32
    %c0_i32_1 = arith.constant 0 : i32
    return %arg0, %c0_i32, %c0_i32_0 : i32, i32, i32
  }
  func.func @transform_1(%arg0: i32) -> (i32, i32) {
    %c0_i32 = arith.constant 0 : i32
    %c0_i32_0 = arith.constant 0 : i32
    %c0_i32_1 = arith.constant 0 : i32
    return %c0_i32, %c0_i32_0 : i32, i32
  }
  func.func @transform_2(%arg0: i32) -> (i32, i32) {
    %c0_i32 = arith.constant 0 : i32
    %c0_i32_0 = arith.constant 0 : i32
    %c0_i32_1 = arith.constant 0 : i32
    return %c0_i32, %c0_i32_0 : i32, i32
  }
  func.func @transform_3(%arg0: i32) -> (i32, i32) {
    %c0_i32 = arith.constant 0 : i32
    %c0_i32_0 = arith.constant 0 : i32
    %c0_i32_1 = arith.constant 0 : i32
    return %c0_i32, %c0_i32_0 : i32, i32
  }
  func.func @transform_4(%arg0: i32) -> (i32, i32) {
    %c0_i32 = arith.constant 0 : i32
    %c0_i32_0 = arith.constant 0 : i32
    %c0_i32_1 = arith.constant 0 : i32
    return %c0_i32, %c0_i32_0 : i32, i32
  }
  func.func @transform_5(%arg0: i32) -> (i32, i32) {
    %c0_i32 = arith.constant 0 : i32
    %c0_i32_0 = arith.constant 0 : i32
    %c0_i32_1 = arith.constant 0 : i32
    return %c0_i32, %c0_i32_0 : i32, i32
  }
  func.func @transform_6(%arg0: i32) -> (i32, i32) {
    %c0_i32 = arith.constant 0 : i32
    %c0_i32_0 = arith.constant 0 : i32
    %c0_i32_1 = arith.constant 0 : i32
    return %c0_i32, %c0_i32_0 : i32, i32
  }
  func.func @transform_7(%arg0: i32) -> (i32, i32) {
    %c0_i32 = arith.constant 0 : i32
    %c0_i32_0 = arith.constant 0 : i32
    %c0_i32_1 = arith.constant 0 : i32
    return %c0_i32, %c0_i32_0 : i32, i32
  }
  func.func @transform_8(%arg0: i32) -> (i32, i32) {
    %c0_i32 = arith.constant 0 : i32
    %c0_i32_0 = arith.constant 0 : i32
    %c0_i32_1 = arith.constant 0 : i32
    return %c0_i32, %c0_i32_0 : i32, i32
  }
  func.func @transform_9(%arg0: i32) -> (i32, i32) {
    %c0_i32 = arith.constant 0 : i32
    %c0_i32_0 = arith.constant 0 : i32
    %c0_i32_1 = arith.constant 0 : i32
    return %c0_i32, %c0_i32_0 : i32, i32
  }
  func.func @transform_10(%arg0: i32) -> (i32, i32) {
    %c0_i32 = arith.constant 0 : i32
    %c0_i32_0 = arith.constant 0 : i32
    %c0_i32_1 = arith.constant 0 : i32
    return %c0_i32, %c0_i32_0 : i32, i32
  }
  func.func @transform_11(%arg0: i32) -> (i32, i32) {
    %c0_i32 = arith.constant 0 : i32
    %c0_i32_0 = arith.constant 0 : i32
    %c0_i32_1 = arith.constant 0 : i32
    return %c0_i32, %c0_i32_0 : i32, i32
  }
  func.func @transform_12(%arg0: i32) -> (i32, i32) {
    %c0_i32 = arith.constant 0 : i32
    %c0_i32_0 = arith.constant 0 : i32
    %c0_i32_1 = arith.constant 0 : i32
    return %c0_i32, %c0_i32_0 : i32, i32
  }
  func.func @transform_13(%arg0: i32) -> (i32, i32) {
    %c0_i32 = arith.constant 0 : i32
    %c0_i32_0 = arith.constant 0 : i32
    %c0_i32_1 = arith.constant 0 : i32
    return %c0_i32, %c0_i32_0 : i32, i32
  }
  func.func @transform_14(%arg0: i32) -> (i32, i32) {
    %c0_i32 = arith.constant 0 : i32
    %c0_i32_0 = arith.constant 0 : i32
    %c0_i32_1 = arith.constant 0 : i32
    return %c0_i32, %c0_i32_0 : i32, i32
  }
  func.func @transform_15(%arg0: i32) -> (i32, i32) {
    %c0_i32 = arith.constant 0 : i32
    %c0_i32_0 = arith.constant 0 : i32
    %c0_i32_1 = arith.constant 0 : i32
    return %c0_i32, %c0_i32_0 : i32, i32
  }
  func.func @transform_16(%arg0: i32) -> (i32, i32) {
    %c0_i32 = arith.constant 0 : i32
    %c0_i32_0 = arith.constant 0 : i32
    %c0_i32_1 = arith.constant 0 : i32
    return %c0_i32, %c0_i32_0 : i32, i32
  }
  func.func @transform_17(%arg0: i32) -> (i32, i32) {
    %c0_i32 = arith.constant 0 : i32
    %c0_i32_0 = arith.constant 0 : i32
    %c0_i32_1 = arith.constant 0 : i32
    return %c0_i32, %c0_i32_0 : i32, i32
  }
  func.func @transform_18(%arg0: i32) -> (i32, i32) {
    %c0_i32 = arith.constant 0 : i32
    %c0_i32_0 = arith.constant 0 : i32
    %c0_i32_1 = arith.constant 0 : i32
    return %c0_i32, %c0_i32_0 : i32, i32
  }
  func.func @transform_19(%arg0: i32) -> (i32, i32, i32) {
    %c0_i32 = arith.constant 0 : i32
    %c0_i32_0 = arith.constant 0 : i32
    %c0_i32_1 = arith.constant 0 : i32
    return %arg0, %c0_i32, %c0_i32_0 : i32, i32, i32
  }
}

</mosaic_0001>

<llo_original>
// kernel: tcn_forward.1
$region0: #{tcn_forward.1}
  #allocation0 [shape = 'u32[]', space=smem, size = 0x4, offset = 0x4, fixed_abs, tag = 'smem constant byte address 0x4 - core index']
  #allocation1 [shape = 'u32[144,128]{1,0:T(1,128)}', space=vmem, size = 0x12000, scoped, tag = 'internal scratch']
  #allocation2 [shape = 'bf16[48,16]{1,0:T(8,128)(2,1)}', space=vmem, size = 0x3000, scoped, tag = 'scratch operand']
  %s0 = inlined_call_operand.vmem [shape: bf16[2,16,16], index: 0, kind: input, shape index: {}]
  %s1 = inlined_call_operand.vmem [shape: bf16[16,48], index: 1, kind: input, shape index: {}]
  %s2 = inlined_call_operand.vmem [shape: f32[16,1], index: 2, kind: input, shape index: {}]
  %s3 = inlined_call_operand.vmem [shape: bf16[16,48], index: 3, kind: input, shape index: {}]
  %s4 = inlined_call_operand.vmem [shape: f32[16,1], index: 4, kind: input, shape index: {}]
  %s5 = inlined_call_operand.vmem [shape: bf16[16,16], index: 5, kind: input, shape index: {}]
  %s6 = inlined_call_operand.vmem [shape: f32[16,1], index: 6, kind: input, shape index: {}]
  %s7 = inlined_call_operand.vmem [shape: bf16[16,48], index: 7, kind: input, shape index: {}]
  %s8 = inlined_call_operand.vmem [shape: f32[16,1], index: 8, kind: input, shape index: {}]
  %s9 = inlined_call_operand.vmem [shape: bf16[16,48], index: 9, kind: input, shape index: {}]
  %s10 = inlined_call_operand.vmem [shape: f32[16,1], index: 10, kind: input, shape index: {}]
  %s11 = inlined_call_operand.vmem [shape: bf16[16,48], index: 11, kind: input, shape index: {}]
  %s12 = inlined_call_operand.vmem [shape: f32[16,1], index: 12, kind: input, shape index: {}]
  %s13 = inlined_call_operand.vmem [shape: bf16[16,48], index: 13, kind: input, shape index: {}]
  %s14 = inlined_call_operand.vmem [shape: f32[16,1], index: 14, kind: input, shape index: {}]
  %s15 = inlined_call_operand.vmem [shape: bf16[16,16], index: 15, kind: input, shape index: {}]
  %s16 = inlined_call_operand.vmem [shape: f32[16,1], index: 16, kind: input, shape index: {}]
  %s17 = inlined_call_operand.vmem [shape: bf16[16,16], index: 17, kind: input, shape index: {}]
  %s18 = inlined_call_operand.vmem [shape: f32[16,1], index: 18, kind: input, shape index: {}]
  %s19 = inlined_call_operand.vmem [shape: f32[2,16,16], index: 19, kind: output, shape index: {}]
  %s20 = sld [smem:[#allocation0]]
  $region109: #{tcn_forward.1} parent=0
    _
  %s22 = ssub.s32 1, %s20
  %s23 = scalar_select 0, %s22, %s20
  loop: start=0, step=1, limit=4
  $region2: #{tcn_forward.1} parent=0 // loop_pre_header
    _
  $region3: #{tcn_forward.1} parent=0 // loop_header
    %s25 = sphi 0, %s29
    %p26 = scmp.ge.s32.totalorder %s25, 4
    %s35 = sphi 0, %s37
    %s38 = sphi 0, %s35
    %s39 = sphi 0, %s38
    %s55 = sphi 0, %s39
    %s59 = sphi 0, %s59
    %s61 = sphi 0, %s59
    %s62 = sphi 0, %s61
    %s76 = sphi 0, %s62
    %s80 = sphi 0, %s80
    %s82 = sphi 0, %s80
    %s83 = sphi 0, %s82
    %s97 = sphi 0, %s83
    %s101 = sphi 0, %s101
    %s103 = sphi 0, %s101
    %s104 = sphi 0, %s103
    %s118 = sphi 0, %s104
    %s122 = sphi 0, %s122
    %s124 = sphi 0, %s122
    %s125 = sphi 0, %s124
    %s139 = sphi 0, %s125
    %s143 = sphi 0, %s143
    %s145 = sphi 0, %s143
    %s146 = sphi 0, %s145
    %s160 = sphi 0, %s146
    %s164 = sphi 0, %s164
    %s166 = sphi 0, %s164
    %s167 = sphi 0, %s166
    %s181 = sphi 0, %s167
    %s185 = sphi 0, %s185
    %s187 = sphi 0, %s185
    %s188 = sphi 0, %s187
    %s202 = sphi 0, %s188
    %s206 = sphi 0, %s206
    %s208 = sphi 0, %s206
    %s209 = sphi 0, %s208
    %s223 = sphi 0, %s209
    %s227 = sphi 0, %s227
    %s229 = sphi 0, %s227
    %s230 = sphi 0, %s229
    %s244 = sphi 0, %s230
    %s248 = sphi 0, %s248
    %s250 = sphi 0, %s248
    %s251 = sphi 0, %s250
    %s265 = sphi 0, %s251
    %s269 = sphi 0, %s269
    %s271 = sphi 0, %s269
    %s272 = sphi 0, %s271
    %s286 = sphi 0, %s272
    %s290 = sphi 0, %s290
    %s292 = sphi 0, %s290
    %s293 = sphi 0, %s292
    %s307 = sphi 0, %s293
    %s311 = sphi 0, %s311
    %s313 = sphi 0, %s311
    %s314 = sphi 0, %s313
    %s328 = sphi 0, %s314
    %s332 = sphi 0, %s332
    %s334 = sphi 0, %s332
    %s335 = sphi 0, %s334
    %s349 = sphi 0, %s335
    %s353 = sphi 0, %s353
    %s355 = sphi 0, %s353
    %s356 = sphi 0, %s355
    %s370 = sphi 0, %s356
    %s374 = sphi 0, %s374
    %s376 = sphi 0, %s374
    %s377 = sphi 0, %s376
    %s391 = sphi 0, %s377
    %s395 = sphi 0, %s395
    %s397 = sphi 0, %s395
    %s398 = sphi 0, %s397
    %s412 = sphi 0, %s398
    %s416 = sphi 0, %s416
    %s418 = sphi 0, %s416
    %s419 = sphi 0, %s418
    %s433 = sphi 0, %s419
    %s439 = sphi 0, %s441
    %s442 = sphi 0, %s439
    %s443 = sphi 0, %s442
    %s459 = sphi 0, %s443
  $region4: #{tcn_forward.1} parent=0 // loop_header_branch
    %28 = sbr.rel (%p26) target = $region8
  $region5: #{tcn_forward.1} parent=0 // loop_body
    %s30 = ssub.s32 %s25, 1
    %s31 = ssub.s32 %s25, 2
    %s32 = sadd.s32 %s25, 1
    %s33 = ssub.s32 %s25, %s32
    %p34 = scmp.eq.s32.totalorder %s33, 0
    %s36 = sadd.s32 %s35, 1
    %s37 = scalar_select %p34, %s35, %s36
    %p40 = pneg %p34
    %p41 = scmp.eq.s32.totalorder %s25, 1
    %p42 = por %p40, %p41
    %p43 = scmp.ne.s32.totalorder %s35, %s38
    %p44 = scmp.eq.s32.totalorder %s25, 0
    %p45 = por %p43, %p44
    %p46 = scmp.ne.s32.totalorder %s35, %s38
    %p47 = scmp.eq.s32.totalorder %s30, 1
    %p48 = por %p46, %p47
    %p49 = scmp.ne.s32.totalorder %s38, %s39
    %p50 = scmp.eq.s32.totalorder %s30, 0
    %p51 = por %p49, %p50
    %p52 = scmp.ne.s32.totalorder %s38, %s39
    %p53 = scmp.eq.s32.totalorder %s31, 1
    %p54 = por %p52, %p53
    %p56 = scmp.ne.s32.totalorder %s39, %s55
    %p57 = scmp.eq.s32.totalorder %s31, 0
    %p58 = por %p56, %p57
    %s60 = sadd.s32 %s59, 1
    %p63 = scmp.eq.s32.totalorder %s25, 1
    %p64 = scmp.ne.s32.totalorder %s59, %s61
    %p65 = scmp.eq.s32.totalorder %s25, 0
    %p66 = por %p64, %p65
    %p67 = scmp.ne.s32.totalorder %s59, %s61
    %p68 = scmp.eq.s32.totalorder %s30, 1
    %p69 = por %p67, %p68
    %p70 = scmp.ne.s32.totalorder %s61, %s62
    %p71 = scmp.eq.s32.totalorder %s30, 0
    %p72 = por %p70, %p71
    %p73 = scmp.ne.s32.totalorder %s61, %s62
    %p74 = scmp.eq.s32.totalorder %s31, 1
    %p75 = por %p73, %p74
    %p77 = scmp.ne.s32.totalorder %s62, %s76
    %p78 = scmp.eq.s32.totalorder %s31, 0
    %p79 = por %p77, %p78
    %s81 = sadd.s32 %s80, 1
    %p84 = scmp.eq.s32.totalorder %s25, 1
    %p85 = scmp.ne.s32.totalorder %s80, %s82
    %p86 = scmp.eq.s32.totalorder %s25, 0
    %p87 = por %p85, %p86
    %p88 = scmp.ne.s32.totalorder %s80, %s82
    %p89 = scmp.eq.s32.totalorder %s30, 1
    %p90 = por %p88, %p89
    %p91 = scmp.ne.s32.totalorder %s82, %s83
    %p92 = scmp.eq.s32.totalorder %s30, 0
    %p93 = por %p91, %p92
    %p94 = scmp.ne.s32.totalorder %s82, %s83
    %p95 = scmp.eq.s32.totalorder %s31, 1
    %p96 = por %p94, %p95
    %p98 = scmp.ne.s32.totalorder %s83, %s97
    %p99 = scmp.eq.s32.totalorder %s31, 0
    %p100 = por %p98, %p99
    %s102 = sadd.s32 %s101, 1
    %p105 = scmp.eq.s32.totalorder %s25, 1
    %p106 = scmp.ne.s32.totalorder %s101, %s103
    %p107 = scmp.eq.s32.totalorder %s25, 0
    %p108 = por %p106, %p107
    %p109 = scmp.ne.s32.totalorder %s101, %s103
    %p110 = scmp.eq.s32.totalorder %s30, 1
    %p111 = por %p109, %p110
    %p112 = scmp.ne.s32.totalorder %s103, %s104
    %p113 = scmp.eq.s32.totalorder %s30, 0
    %p114 = por %p112, %p113
    %p115 = scmp.ne.s32.totalorder %s103, %s104
    %p116 = scmp.eq.s32.totalorder %s31, 1
    %p117 = por %p115, %p116
    %p119 = scmp.ne.s32.totalorder %s104, %s118
    %p120 = scmp.eq.s32.totalorder %s31, 0
    %p121 = por %p119, %p120
    %s123 = sadd.s32 %s122, 1
    %p126 = scmp.eq.s32.totalorder %s25, 1
    %p127 = scmp.ne.s32.totalorder %s122, %s124
    %p128 = scmp.eq.s32.totalorder %s25, 0
    %p129 = por %p127, %p128
    %p130 = scmp.ne.s32.totalorder %s122, %s124
    %p131 = scmp.eq.s32.totalorder %s30, 1
    %p132 = por %p130, %p131
    %p133 = scmp.ne.s32.totalorder %s124, %s125
    %p134 = scmp.eq.s32.totalorder %s30, 0
    %p135 = por %p133, %p134
    %p136 = scmp.ne.s32.totalorder %s124, %s125
    %p137 = scmp.eq.s32.totalorder %s31, 1
    %p138 = por %p136, %p137
    %p140 = scmp.ne.s32.totalorder %s125, %s139
    %p141 = scmp.eq.s32.totalorder %s31, 0
    %p142 = por %p140, %p141
    %s144 = sadd.s32 %s143, 1
    %p147 = scmp.eq.s32.totalorder %s25, 1
    %p148 = scmp.ne.s32.totalorder %s143, %s145
    %p149 = scmp.eq.s32.totalorder %s25, 0
    %p150 = por %p148, %p149
    %p151 = scmp.ne.s32.totalorder %s143, %s145
    %p152 = scmp.eq.s32.totalorder %s30, 1
    %p153 = por %p151, %p152
    %p154 = scmp.ne.s32.totalorder %s145, %s146
    %p155 = scmp.eq.s32.totalorder %s30, 0
    %p156 = por %p154, %p155
    %p157 = scmp.ne.s32.totalorder %s145, %s146
    %p158 = scmp.eq.s32.totalorder %s31, 1
    %p159 = por %p157, %p158
    %p161 = scmp.ne.s32.totalorder %s146, %s160
    %p162 = scmp.eq.s32.totalorder %s31, 0
    %p163 = por %p161, %p162
    %s165 = sadd.s32 %s164, 1
    %p168 = scmp.eq.s32.totalorder %s25, 1
    %p169 = scmp.ne.s32.totalorder %s164, %s166
    %p170 = scmp.eq.s32.totalorder %s25, 0
    %p171 = por %p169, %p170
    %p172 = scmp.ne.s32.totalorder %s164, %s166
    %p173 = scmp.eq.s32.totalorder %s30, 1
    %p174 = por %p172, %p173
    %p175 = scmp.ne.s32.totalorder %s166, %s167
    %p176 = scmp.eq.s32.totalorder %s30, 0
    %p177 = por %p175, %p176
    %p178 = scmp.ne.s32.totalorder %s166, %s167
    %p179 = scmp.eq.s32.totalorder %s31, 1
    %p180 = por %p178, %p179
    %p182 = scmp.ne.s32.totalorder %s167, %s181
    %p183 = scmp.eq.s32.totalorder %s31, 0
    %p184 = por %p182, %p183
    %s186 = sadd.s32 %s185, 1
    %p189 = scmp.eq.s32.totalorder %s25, 1
    %p190 = scmp.ne.s32.totalorder %s185, %s187
    %p191 = scmp.eq.s32.totalorder %s25, 0
    %p192 = por %p190, %p191
    %p193 = scmp.ne.s32.totalorder %s185, %s187
    %p194 = scmp.eq.s32.totalorder %s30, 1
    %p195 = por %p193, %p194
    %p196 = scmp.ne.s32.totalorder %s187, %s188
    %p197 = scmp.eq.s32.totalorder %s30, 0
    %p198 = por %p196, %p197
    %p199 = scmp.ne.s32.totalorder %s187, %s188
    %p200 = scmp.eq.s32.totalorder %s31, 1
    %p201 = por %p199, %p200
    %p203 = scmp.ne.s32.totalorder %s188, %s202
    %p204 = scmp.eq.s32.totalorder %s31, 0
    %p205 = por %p203, %p204
    %s207 = sadd.s32 %s206, 1
    %p210 = scmp.eq.s32.totalorder %s25, 1
    %p211 = scmp.ne.s32.totalorder %s206, %s208
    %p212 = scmp.eq.s32.totalorder %s25, 0
    %p213 = por %p211, %p212
    %p214 = scmp.ne.s32.totalorder %s206, %s208
    %p215 = scmp.eq.s32.totalorder %s30, 1
    %p216 = por %p214, %p215
    %p217 = scmp.ne.s32.totalorder %s208, %s209
    %p218 = scmp.eq.s32.totalorder %s30, 0
    %p219 = por %p217, %p218
    %p220 = scmp.ne.s32.totalorder %s208, %s209
    %p221 = scmp.eq.s32.totalorder %s31, 1
    %p222 = por %p220, %p221
    %p224 = scmp.ne.s32.totalorder %s209, %s223
    %p225 = scmp.eq.s32.totalorder %s31, 0
    %p226 = por %p224, %p225
    %s228 = sadd.s32 %s227, 1
    %p231 = scmp.eq.s32.totalorder %s25, 1
    %p232 = scmp.ne.s32.totalorder %s227, %s229
    %p233 = scmp.eq.s32.totalorder %s25, 0
    %p234 = por %p232, %p233
    %p235 = scmp.ne.s32.totalorder %s227, %s229
    %p236 = scmp.eq.s32.totalorder %s30, 1
    %p237 = por %p235, %p236
    %p238 = scmp.ne.s32.totalorder %s229, %s230
    %p239 = scmp.eq.s32.totalorder %s30, 0
    %p240 = por %p238, %p239
    %p241 = scmp.ne.s32.totalorder %s229, %s230
    %p242 = scmp.eq.s32.totalorder %s31, 1
    %p243 = por %p241, %p242
    %p245 = scmp.ne.s32.totalorder %s230, %s244
    %p246 = scmp.eq.s32.totalorder %s31, 0
    %p247 = por %p245, %p246
    %s249 = sadd.s32 %s248, 1
    %p252 = scmp.eq.s32.totalorder %s25, 1
    %p253 = scmp.ne.s32.totalorder %s248, %s250
    %p254 = scmp.eq.s32.totalorder %s25, 0
    %p255 = por %p253, %p254
    %p256 = scmp.ne.s32.totalorder %s248, %s250
    %p257 = scmp.eq.s32.totalorder %s30, 1
    %p258 = por %p256, %p257
    %p259 = scmp.ne.s32.totalorder %s250, %s251
    %p260 = scmp.eq.s32.totalorder %s30, 0
    %p261 = por %p259, %p260
    %p262 = scmp.ne.s32.totalorder %s250, %s251
    %p263 = scmp.eq.s32.totalorder %s31, 1
    %p264 = por %p262, %p263
    %p266 = scmp.ne.s32.totalorder %s251, %s265
    %p267 = scmp.eq.s32.totalorder %s31, 0
    %p268 = por %p266, %p267
    %s270 = sadd.s32 %s269, 1
    %p273 = scmp.eq.s32.totalorder %s25, 1
    %p274 = scmp.ne.s32.totalorder %s269, %s271
    %p275 = scmp.eq.s32.totalorder %s25, 0
    %p276 = por %p274, %p275
    %p277 = scmp.ne.s32.totalorder %s269, %s271
    %p278 = scmp.eq.s32.totalorder %s30, 1
    %p279 = por %p277, %p278
    %p280 = scmp.ne.s32.totalorder %s271, %s272
    %p281 = scmp.eq.s32.totalorder %s30, 0
    %p282 = por %p280, %p281
    %p283 = scmp.ne.s32.totalorder %s271, %s272
    %p284 = scmp.eq.s32.totalorder %s31, 1
    %p285 = por %p283, %p284
    %p287 = scmp.ne.s32.totalorder %s272, %s286
    %p288 = scmp.eq.s32.totalorder %s31, 0
    %p289 = por %p287, %p288
    %s291 = sadd.s32 %s290, 1
    %p294 = scmp.eq.s32.totalorder %s25, 1
    %p295 = scmp.ne.s32.totalorder %s290, %s292
    %p296 = scmp.eq.s32.totalorder %s25, 0
    %p297 = por %p295, %p296
    %p298 = scmp.ne.s32.totalorder %s290, %s292
    %p299 = scmp.eq.s32.totalorder %s30, 1
    %p300 = por %p298, %p299
    %p301 = scmp.ne.s32.totalorder %s292, %s293
    %p302 = scmp.eq.s32.totalorder %s30, 0
    %p303 = por %p301, %p302
    %p304 = scmp.ne.s32.totalorder %s292, %s293
    %p305 = scmp.eq.s32.totalorder %s31, 1
    %p306 = por %p304, %p305
    %p308 = scmp.ne.s32.totalorder %s293, %s307
    %p309 = scmp.eq.s32.totalorder %s31, 0
    %p310 = por %p308, %p309
    %s312 = sadd.s32 %s311, 1
    %p315 = scmp.eq.s32.totalorder %s25, 1
    %p316 = scmp.ne.s32.totalorder %s311, %s313
    %p317 = scmp.eq.s32.totalorder %s25, 0
    %p318 = por %p316, %p317
    %p319 = scmp.ne.s32.totalorder %s311, %s313
    %p320 = scmp.eq.s32.totalorder %s30, 1
    %p321 = por %p319, %p320
    %p322 = scmp.ne.s32.totalorder %s313, %s314
    %p323 = scmp.eq.s32.totalorder %s30, 0
    %p324 = por %p322, %p323
    %p325 = scmp.ne.s32.totalorder %s313, %s314
    %p326 = scmp.eq.s32.totalorder %s31, 1
    %p327 = por %p325, %p326
    %p329 = scmp.ne.s32.totalorder %s314, %s328
    %p330 = scmp.eq.s32.totalorder %s31, 0
    %p331 = por %p329, %p330
    %s333 = sadd.s32 %s332, 1
    %p336 = scmp.eq.s32.totalorder %s25, 1
    %p337 = scmp.ne.s32.totalorder %s332, %s334
    %p338 = scmp.eq.s32.totalorder %s25, 0
    %p339 = por %p337, %p338
    %p340 = scmp.ne.s32.totalorder %s332, %s334
    %p341 = scmp.eq.s32.totalorder %s30, 1
    %p342 = por %p340, %p341
    %p343 = scmp.ne.s32.totalorder %s334, %s335
    %p344 = scmp.eq.s32.totalorder %s30, 0
    %p345 = por %p343, %p344
    %p346 = scmp.ne.s32.totalorder %s334, %s335
    %p347 = scmp.eq.s32.totalorder %s31, 1
    %p348 = por %p346, %p347
    %p350 = scmp.ne.s32.totalorder %s335, %s349
    %p351 = scmp.eq.s32.totalorder %s31, 0
    %p352 = por %p350, %p351
    %s354 = sadd.s32 %s353, 1
    %p357 = scmp.eq.s32.totalorder %s25, 1
    %p358 = scmp.ne.s32.totalorder %s353, %s355
    %p359 = scmp.eq.s32.totalorder %s25, 0
    %p360 = por %p358, %p359
    %p361 = scmp.ne.s32.totalorder %s353, %s355
    %p362 = scmp.eq.s32.totalorder %s30, 1
    %p363 = por %p361, %p362
    %p364 = scmp.ne.s32.totalorder %s355, %s356
    %p365 = scmp.eq.s32.totalorder %s30, 0
    %p366 = por %p364, %p365
    %p367 = scmp.ne.s32.totalorder %s355, %s356
    %p368 = scmp.eq.s32.totalorder %s31, 1
    %p369 = por %p367, %p368
    %p371 = scmp.ne.s32.totalorder %s356, %s370
    %p372 = scmp.eq.s32.totalorder %s31, 0
    %p373 = por %p371, %p372
    %s375 = sadd.s32 %s374, 1
    %p378 = scmp.eq.s32.totalorder %s25, 1
    %p379 = scmp.ne.s32.totalorder %s374, %s376
    %p380 = scmp.eq.s32.totalorder %s25, 0
    %p381 = por %p379, %p380
    %p382 = scmp.ne.s32.totalorder %s374, %s376
    %p383 = scmp.eq.s32.totalorder %s30, 1
    %p384 = por %p382, %p383
    %p385 = scmp.ne.s32.totalorder %s376, %s377
    %p386 = scmp.eq.s32.totalorder %s30, 0
    %p387 = por %p385, %p386
    %p388 = scmp.ne.s32.totalorder %s376, %s377
    %p389 = scmp.eq.s32.totalorder %s31, 1
    %p390 = por %p388, %p389
    %p392 = scmp.ne.s32.totalorder %s377, %s391
    %p393 = scmp.eq.s32.totalorder %s31, 0
    %p394 = por %p392, %p393
    %s396 = sadd.s32 %s395, 1
    %p399 = scmp.eq.s32.totalorder %s25, 1
    %p400 = scmp.ne.s32.totalorder %s395, %s397
    %p401 = scmp.eq.s32.totalorder %s25, 0
    %p402 = por %p400, %p401
    %p403 = scmp.ne.s32.totalorder %s395, %s397
    %p404 = scmp.eq.s32.totalorder %s30, 1
    %p405 = por %p403, %p404
    %p406 = scmp.ne.s32.totalorder %s397, %s398
    %p407 = scmp.eq.s32.totalorder %s30, 0
    %p408 = por %p406, %p407
    %p409 = scmp.ne.s32.totalorder %s397, %s398
    %p410 = scmp.eq.s32.totalorder %s31, 1
    %p411 = por %p409, %p410
    %p413 = scmp.ne.s32.totalorder %s398, %s412
    %p414 = scmp.eq.s32.totalorder %s31, 0
    %p415 = por %p413, %p414
    %s417 = sadd.s32 %s416, 1
    %p420 = scmp.eq.s32.totalorder %s25, 1
    %p421 = scmp.ne.s32.totalorder %s416, %s418
    %p422 = scmp.eq.s32.totalorder %s25, 0
    %p423 = por %p421, %p422
    %p424 = scmp.ne.s32.totalorder %s416, %s418
    %p425 = scmp.eq.s32.totalorder %s30, 1
    %p426 = por %p424, %p425
    %p427 = scmp.ne.s32.totalorder %s418, %s419
    %p428 = scmp.eq.s32.totalorder %s30, 0
    %p429 = por %p427, %p428
    %p430 = scmp.ne.s32.totalorder %s418, %s419
    %p431 = scmp.eq.s32.totalorder %s31, 1
    %p432 = por %p430, %p431
    %p434 = scmp.ne.s32.totalorder %s419, %s433
    %p435 = scmp.eq.s32.totalorder %s31, 0
    %p436 = por %p434, %p435
    %s437 = ssub.s32 %s25, %s32
    %p438 = scmp.eq.s32.totalorder %s437, 0
    %s440 = sadd.s32 %s439, 1
    %s441 = scalar_select %p438, %s439, %s440
    %p444 = pneg %p438
    %p445 = scmp.eq.s32.totalorder %s25, 1
    %p446 = por %p444, %p445
    %p447 = scmp.ne.s32.totalorder %s439, %s442
    %p448 = scmp.eq.s32.totalorder %s25, 0
    %p449 = por %p447, %p448
    %p450 = scmp.ne.s32.totalorder %s439, %s442
    %p451 = scmp.eq.s32.totalorder %s30, 1
    %p452 = por %p450, %p451
    %p453 = scmp.ne.s32.totalorder %s442, %s443
    %p454 = scmp.eq.s32.totalorder %s30, 0
    %p455 = por %p453, %p454
    %p456 = scmp.ne.s32.totalorder %s442, %s443
    %p457 = scmp.eq.s32.totalorder %s31, 1
    %p458 = por %p456, %p457
    %p460 = scmp.ne.s32.totalorder %s443, %s459
    %p461 = scmp.eq.s32.totalorder %s31, 0
    %p462 = por %p460, %p461
    %p463 = scmp.le.s32.totalorder 1, %s25
    %p464 = scmp.lt.s32.totalorder %s25, 3
    %p465 = pnand %p463, %p464
    %p466 = pneg %p465
    // Predicated region
    $region9: #{tcn_forward.1} parent=5 // pred_check
      _
    $region10: #{tcn_forward.1} parent=5 // pred_check_branch
      %468 = sbr.rel (%p465) target = $region12
    $region11: #{tcn_forward.1} parent=5 // pred_region
      %s469 = ssub.s32 %s25, 1
      // Predicated region
      $region13: #{tcn_forward.1} parent=11 // pred_check
        %p470 = pneg %p72
      $region14: #{tcn_forward.1} parent=11 // pred_check_branch
        %472 = sbr.rel (%p470) target = $region16
      $region15: #{tcn_forward.1} parent=11 // pred_region
        _
      $region16: #{tcn_forward.1} parent=11 // pred_fallthru
        _
      // Predicated region
      $region17: #{tcn_forward.1} parent=11 // pred_check
        %p473 = pneg %p93
      $region18: #{tcn_forward.1} parent=11 // pred_check_branch
        %475 = sbr.rel (%p473) target = $region20
      $region19: #{tcn_forward.1} parent=11 // pred_region
        _
      $region20: #{tcn_forward.1} parent=11 // pred_fallthru
        _
      // Predicated region
      $region21: #{tcn_forward.1} parent=11 // pred_check
        %p476 = pneg %p114
      $region22: #{tcn_forward.1} parent=11 // pred_check_branch
        %478 = sbr.rel (%p476) target = $region24
      $region23: #{tcn_forward.1} parent=11 // pred_region
        _
      $region24: #{tcn_forward.1} parent=11 // pred_fallthru
        _
      // Predicated region
      $region25: #{tcn_forward.1} parent=11 // pred_check
        %p479 = pneg %p135
      $region26: #{tcn_forward.1} parent=11 // pred_check_branch
        %481 = sbr.rel (%p479) target = $region28
      $region27: #{tcn_forward.1} parent=11 // pred_region
        _
      $region28: #{tcn_forward.1} parent=11 // pred_fallthru
        _
      // Predicated region
      $region29: #{tcn_forward.1} parent=11 // pred_check
        %p482 = pneg %p156
      $region30: #{tcn_forward.1} parent=11 // pred_check_branch
        %484 = sbr.rel (%p482) target = $region32
      $region31: #{tcn_forward.1} parent=11 // pred_region
        _
      $region32: #{tcn_forward.1} parent=11 // pred_fallthru
        _
      // Predicated region
      $region33: #{tcn_forward.1} parent=11 // pred_check
        %p485 = pneg %p177
      $region34: #{tcn_forward.1} parent=11 // pred_check_branch
        %487 = sbr.rel (%p485) target = $region36
      $region35: #{tcn_forward.1} parent=11 // pred_region
        _
      $region36: #{tcn_forward.1} parent=11 // pred_fallthru
        _
      // Predicated region
      $region37: #{tcn_forward.1} parent=11 // pred_check
        %p488 = pneg %p198
      $region38: #{tcn_forward.1} parent=11 // pred_check_branch
        %490 = sbr.rel (%p488) target = $region40
      $region39: #{tcn_forward.1} parent=11 // pred_region
        _
      $region40: #{tcn_forward.1} parent=11 // pred_fallthru
        _
      // Predicated region
      $region41: #{tcn_forward.1} parent=11 // pred_check
        %p491 = pneg %p219
      $region42: #{tcn_forward.1} parent=11 // pred_check_branch
        %493 = sbr.rel (%p491) target = $region44
      $region43: #{tcn_forward.1} parent=11 // pred_region
        _
      $region44: #{tcn_forward.1} parent=11 // pred_fallthru
        _
      // Predicated region
      $region45: #{tcn_forward.1} parent=11 // pred_check
        %p494 = pneg %p240
      $region46: #{tcn_forward.1} parent=11 // pred_check_branch
        %496 = sbr.rel (%p494) target = $region48
      $region47: #{tcn_forward.1} parent=11 // pred_region
        _
      $region48: #{tcn_forward.1} parent=11 // pred_fallthru
        _
      // Predicated region
      $region49: #{tcn_forward.1} parent=11 // pred_check
        %p497 = pneg %p261
      $region50: #{tcn_forward.1} parent=11 // pred_check_branch
        %499 = sbr.rel (%p497) target = $region52
      $region51: #{tcn_forward.1} parent=11 // pred_region
        _
      $region52: #{tcn_forward.1} parent=11 // pred_fallthru
        _
      // Predicated region
      $region53: #{tcn_forward.1} parent=11 // pred_check
        %p500 = pneg %p282
      $region54: #{tcn_forward.1} parent=11 // pred_check_branch
        %502 = sbr.rel (%p500) target = $region56
      $region55: #{tcn_forward.1} parent=11 // pred_region
        _
      $region56: #{tcn_forward.1} parent=11 // pred_fallthru
        _
      // Predicated region
      $region57: #{tcn_forward.1} parent=11 // pred_check
        %p503 = pneg %p303
      $region58: #{tcn_forward.1} parent=11 // pred_check_branch
        %505 = sbr.rel (%p503) target = $region60
      $region59: #{tcn_forward.1} parent=11 // pred_region
        _
      $region60: #{tcn_forward.1} parent=11 // pred_fallthru
        _
      // Predicated region
      $region61: #{tcn_forward.1} parent=11 // pred_check
        %p506 = pneg %p324
      $region62: #{tcn_forward.1} parent=11 // pred_check_branch
        %508 = sbr.rel (%p506) target = $region64
      $region63: #{tcn_forward.1} parent=11 // pred_region
        _
      $region64: #{tcn_forward.1} parent=11 // pred_fallthru
        _
      // Predicated region
      $region65: #{tcn_forward.1} parent=11 // pred_check
        %p509 = pneg %p345
      $region66: #{tcn_forward.1} parent=11 // pred_check_branch
        %511 = sbr.rel (%p509) target = $region68
      $region67: #{tcn_forward.1} parent=11 // pred_region
        _
      $region68: #{tcn_forward.1} parent=11 // pred_fallthru
        _
      // Predicated region
      $region69: #{tcn_forward.1} parent=11 // pred_check
        %p512 = pneg %p366
      $region70: #{tcn_forward.1} parent=11 // pred_check_branch
        %514 = sbr.rel (%p512) target = $region72
      $region71: #{tcn_forward.1} parent=11 // pred_region
        _
      $region72: #{tcn_forward.1} parent=11 // pred_fallthru
        _
      // Predicated region
      $region73: #{tcn_forward.1} parent=11 // pred_check
        %p515 = pneg %p387
      $region74: #{tcn_forward.1} parent=11 // pred_check_branch
        %517 = sbr.rel (%p515) target = $region76
      $region75: #{tcn_forward.1} parent=11 // pred_region
        _
      $region76: #{tcn_forward.1} parent=11 // pred_fallthru
        _
      // Predicated region
      $region77: #{tcn_forward.1} parent=11 // pred_check
        %p518 = pneg %p408
      $region78: #{tcn_forward.1} parent=11 // pred_check_branch
        %520 = sbr.rel (%p518) target = $region80
      $region79: #{tcn_forward.1} parent=11 // pred_region
        _
      $region80: #{tcn_forward.1} parent=11 // pred_fallthru
        _
      // Predicated region
      $region81: #{tcn_forward.1} parent=11 // pred_check
        %p521 = pneg %p429
      $region82: #{tcn_forward.1} parent=11 // pred_check_branch
        %523 = sbr.rel (%p521) target = $region84
      $region83: #{tcn_forward.1} parent=11 // pred_region
        _
      $region84: #{tcn_forward.1} parent=11 // pred_fallthru
        _
    $region12: #{tcn_forward.1} parent=5 // pred_fallthru
      _
    %p524 = scmp.lt.s32.totalorder %s25, 2
    // Predicated region
    $region85: #{tcn_forward.1} parent=5 // pred_check
      %p525 = pneg %p524
    $region86: #{tcn_forward.1} parent=5 // pred_check_branch
      %527 = sbr.rel (%p525) target = $region88
    $region87: #{tcn_forward.1} parent=5 // pred_region
      // Predicated region
      $region89: #{tcn_forward.1} parent=87 // pred_check
        %p528 = pneg %p45
      $region90: #{tcn_forward.1} parent=87 // pred_check_branch
        %530 = sbr.rel (%p528) target = $region92
      $region91: #{tcn_forward.1} parent=87 // pred_region
        %p531 = scmp.lt.s32.totalorder %s25, 1
        %s532 = scalar_select %p531, %s25, 1
        %s533 = smul.addr %s532, 2
        %s534 = smul.addr %s533, 4
        %s535 = scalar_lea.vmem %s0, %s534
      $region92: #{tcn_forward.1} parent=87 // pred_fallthru
        _
    $region88: #{tcn_forward.1} parent=5 // pred_fallthru
      _
    %p536 = scmp.le.s32.totalorder 1, %s25
    %p537 = scmp.lt.s32.totalorder %s25, 3
    %p538 = pnand %p536, %p537
    %p539 = pneg %p538
    // Predicated region
    $region93: #{tcn_forward.1} parent=5 // pred_check
      _
    $region94: #{tcn_forward.1} parent=5 // pred_check_branch
      %541 = sbr.rel (%p538) target = $region96
    $region95: #{tcn_forward.1} parent=5 // pred_region
      %s542 = ssub.s32 %s25, 1
      %p543 = scmp.lt.s32.totalorder %s30, 1
      %s544 = scalar_select %p543, %s30, 1
      %s545 = smul.addr %s544, 2
      %s546 = smul.addr %s545, 4
      %s547 = scalar_lea.vmem %s0, %s546
      %p548 = pneg %p51
      %p549 = pneg %p48
      %p550 = pneg %p72
      %p551 = pneg %p69
      %p552 = pneg %p93
      %p553 = pneg %p90
      %p554 = pneg %p114
      %p555 = pneg %p111
      %p556 = pneg %p135
      %p557 = pneg %p132
      %p558 = pneg %p156
      %p559 = pneg %p153
      %p560 = pneg %p177
      %p561 = pneg %p174
      %p562 = pneg %p198
      %p563 = pneg %p195
      %p564 = pneg %p219
      %p565 = pneg %p216
      %p566 = pneg %p240
      %p567 = pneg %p237
      %p568 = pneg %p261
      %p569 = pneg %p258
      %p570 = pneg %p282
      %p571 = pneg %p279
      %p572 = pneg %p303
      %p573 = pneg %p300
      %p574 = pneg %p324
      %p575 = pneg %p321
      %p576 = pneg %p345
      %p577 = pneg %p342
      %p578 = pneg %p366
      %p579 = pneg %p363
      %p580 = pneg %p387
      %p581 = pneg %p384
      %p582 = pneg %p408
      %p583 = pneg %p405
      %p584 = pneg %p429
      %p585 = pneg %p426
      %p586 = pneg %p455
      %p587 = pneg %p452
      %p588 = scmp.lt.s32.totalorder %s30, 1
      %s589 = scalar_select %p588, %s30, 1
      %s590 = smul.addr %s589, 2
      %s591 = smul.addr %s590, 8
      %s592 = scalar_lea.vmem %s19, %s591
      %p593 = scmp.lt.s32.totalorder %s30, 1
      %s594 = scalar_select %p593, %s30, 1
      %s595 = smul.addr %s594, 2
      %s596 = smul.addr %s595, 4
      %s597 = scalar_lea.vmem %s0, %s596
      %p598 = scmp.lt.s32.totalorder %s30, 1
      %s599 = scalar_select %p598, %s30, 1
      %s600 = smul.addr %s599, 2
      %s601 = smul.addr %s600, 8
      %s602 = scalar_lea.vmem %s19, %s601
      %v604 = vld [vmem:[%s597] sm:$0xf]
      %v605 = vld [vmem:[%s597 + $0x4] sm:$0xf]
      %vm606 = vcmask 11264
      %607 = vst.msk [vmem:[#allocation2] sm:$0xf] %vm606, 0
      %608 = vst.msk [vmem:[#allocation2 + $0x4] sm:$0xf] %vm606, 0
      %611 = vrot.lane.b32.xlu0 %v604, 2
      %v612 = vpop.permute.xlu0 %611
      %613 = vrot.lane.b32.xlu0 %v605, 2
      %v614 = vpop.permute.xlu0 %613
      %vm617 = vcmask 125968
      %618 = vst.msk [vmem:[#allocation2] sm:$0xf] %vm617, %v612
      %619 = vst.msk [vmem:[#allocation2 + $0x4] sm:$0xf] %vm617, %v614
      %vm620 = vcmask 3072
      %621 = vst.msk [vmem:[#allocation2 + $0x8] sm:$0xf] %vm620, 0
      %622 = vst.msk [vmem:[#allocation2 + $0xc] sm:$0xf] %vm620, 0
      %623 = vrot.lane.b32.xlu0 %v604, 1
      %v624 = vpop.permute.xlu0 %623
      %625 = vrot.lane.b32.xlu0 %v605, 1
      %v626 = vpop.permute.xlu0 %625
      %vm629 = vcmask 125960
      %630 = vst.msk [vmem:[#allocation2 + $0x8] sm:$0xf] %vm629, %v624
      %631 = vst.msk [vmem:[#allocation2 + $0xc] sm:$0xf] %vm629, %v626
      %vm632 = vcmask 125952
      %633 = vst.msk [vmem:[#allocation2 + $0x10] sm:$0xf] %vm632, %v604
      %634 = vst.msk [vmem:[#allocation2 + $0x14] sm:$0xf] %vm632, %v605
      %v635 = vld [vmem:[%s1] sm:$0xf]
      %v636 = vld [vmem:[%s1 + $0x4] sm:$0xf]
      %v637 = vld [vmem:[#allocation2] sm:$0xf]
      %v638 = vld [vmem:[#allocation2 + $0x4] sm:$0xf]
      %v639 = vld [vmem:[#allocation2 + $0x8] sm:$0xf]
      %v640 = vld [vmem:[#allocation2 + $0xc] sm:$0xf]
      %v641 = vld [vmem:[#allocation2 + $0x10] sm:$0xf]
      %v642 = vld [vmem:[#allocation2 + $0x14] sm:$0xf]
      %v643 = vld [vmem:[%s2] sm:$0xff]
      %v644 = vld [vmem:[%s2 + $0x8] sm:$0xff]
      %646 = vset.pattern.permute.xlu0 0
      %647 = vperm.xlu0 %646, %v643
      %v648 = vpop.permute.xlu0 %647
      %651 = vset.pattern.permute.xlu0 0
      %652 = vperm.xlu0 %651, %v644
      %v653 = vpop.permute.xlu0 %652
      %v657 = vunpack.c.l.b16 %v635
      %v658 = vunpack.c.l.b16 %v636
      %v659 = vpack.c.b16 %v658, %v657
      %v666 = vunpack.c.l.b16 %v637
      %v667 = vunpack.c.l.b16 %v638
      %v668 = vunpack.c.l.b16 %v639
      %v669 = vunpack.c.l.b16 %v640
      %v670 = vunpack.c.l.b16 %v641
      %v671 = vunpack.c.l.b16 %v642
      %v672 = vpack.c.b16 %v667, %v666
      %v673 = vpack.c.b16 %v669, %v668
      %v674 = vpack.c.b16 %v671, %v670
      %vm678 = vcmask 392192
      %v680 = vsel %vm678, %v659, 0
      %682 = vmatprep.subr.bf16.mxu0 0
      %683 = vmatpush1.bf16.msra.mxu0 0
      %684 = vmatprep.subr.bf16.mxu0 0
      %685 = vmatpush1.bf16.msra.mxu0 0
      %686 = vmatprep.subr.bf16.mxu0 0
      %687 = vmatpush1.bf16.msra.mxu0 0
      %688 = vmatprep.subr.bf16.mxu0 0
      %689 = vmatpush1.bf16.msra.mxu0 0
      %690 = vmatprep.subr.bf16.mxu0 0
      %691 = vmatpush1.bf16.msra.mxu0 0
      %692 = vmatprep.subr.bf16.mxu0 0
      %693 = vmatpush1.bf16.msra.mxu0 %v674
      %694 = vmatprep.subr.bf16.mxu0 0
      %695 = vmatpush1.bf16.msra.mxu0 %v673
      %696 = vmatprep.subr.bf16.mxu0 0
      %697 = vmatpush1.bf16.msra.mxu0 %v672
      %698 = vmatprep.subr.bf16.mxu0 0
      %699 = vmatpush2.bf16.msra.mxu0 0
      %700 = vmatprep.subr.bf16.mxu0 0
      %701 = vmatpush2.bf16.msra.mxu0 0
      %702 = vmatprep.subr.bf16.mxu0 0
      %703 = vmatpush2.bf16.msra.mxu0 0
      %704 = vmatprep.subr.bf16.mxu0 0
      %705 = vmatpush2.bf16.msra.mxu0 0
      %706 = vmatprep.subr.bf16.mxu0 0
      %707 = vmatpush2.bf16.msra.mxu0 0
      %708 = vmatprep.subr.bf16.mxu0 0
      %709 = vmatpush2.bf16.msra.mxu0 0
      %710 = vmatprep.subr.bf16.mxu0 0
      %711 = vmatpush2.bf16.msra.mxu0 0
      %712 = vmatprep.subr.bf16.mxu0 0
      %713 = vmatpush2.bf16.msra.mxu0 0
      %714 = vmatprep.mubr.bf16.mxu0 0
      %715 = vmatmul.mubr.bf16.gmra.mxu0 %v680
      %v716 = vpop.f32.mrf.mxu0
      %v717 = vadd.f32 %v648, %v716
      %v718 = vpop.f32.mrf.mxu0
      %v719 = vpop.f32.mrf.mxu0
      %v720 = vadd.f32 %v653, %v719
      %v721 = vpop.f32.mrf.mxu0
      %722 = vdwg.mxu0
      %vm723 = vcmp.ge.f32.partialorder %v717, 0.0
      %vm724 = vcmp.ge.f32.partialorder %v720, 0.0
      %v725 = vmul.f32 %v717, 0.1
      %v726 = vmul.f32 %v720, 0.1
      %v727 = vsel %vm723, %v717, %v725
      %v728 = vsel %vm724, %v720, %v726
      %v729 = vpack.c.bf16 %v728, %v727
      %730 = vst.msk [vmem:[#allocation2] sm:$0xf] %vm606, 0
      %731 = vst.msk [vmem:[#allocation2 + $0x4] sm:$0xf] %vm606, 0
      %v733 = vunpack.c.l.b16 %v729
      %v734 = vunpack.c.h.b16 %v729
      %v735 = vpack.c.b16 %v733, %v733
      %v736 = vpack.c.b16 %v734, %v734
      %737 = vrot.lane.b32.xlu0 %v735, 2
      %v738 = vpop.permute.xlu0 %737
      %739 = vrot.lane.b32.xlu0 %v736, 2
      %v740 = vpop.permute.xlu0 %739
      %743 = vst.msk [vmem:[#allocation2] sm:$0xf] %vm617, %v738
      %744 = vst.msk [vmem:[#allocation2 + $0x4] sm:$0xf] %vm617, %v740
      %745 = vst.msk [vmem:[#allocation2 + $0x8] sm:$0xf] %vm620, 0
      %746 = vst.msk [vmem:[#allocation2 + $0xc] sm:$0xf] %vm620, 0
      %747 = vrot.lane.b32.xlu0 %v735, 1
      %v748 = vpop.permute.xlu0 %747
      %749 = vrot.lane.b32.xlu0 %v736, 1
      %v750 = vpop.permute.xlu0 %749
      %753 = vst.msk [vmem:[#allocation2 + $0x8] sm:$0xf] %vm629, %v748
      %754 = vst.msk [vmem:[#allocation2 + $0xc] sm:$0xf] %vm629, %v750
      %757 = vst.msk [vmem:[#allocation2 + $0x10] sm:$0xf] %vm632, %v735
      %758 = vst.msk [vmem:[#allocation2 + $0x14] sm:$0xf] %vm632, %v736
      %v759 = vld [vmem:[%s3] sm:$0xf]
      %v760 = vld [vmem:[%s3 + $0x4] sm:$0xf]
      %v761 = vld [vmem:[#allocation2] sm:$0xf]
      %v762 = vld [vmem:[#allocation2 + $0x4] sm:$0xf]
      %v763 = vld [vmem:[#allocation2 + $0x8] sm:$0xf]
      %v764 = vld [vmem:[#allocation2 + $0xc] sm:$0xf]
      %v765 = vld [vmem:[#allocation2 + $0x10] sm:$0xf]
      %v766 = vld [vmem:[#allocation2 + $0x14] sm:$0xf]
      %v767 = vld [vmem:[%s4] sm:$0xff]
      %v768 = vld [vmem:[%s4 + $0x8] sm:$0xff]
      %770 = vset.pattern.permute.xlu0 0
      %771 = vperm.xlu0 %770, %v767
      %v772 = vpop.permute.xlu0 %771
      %775 = vset.pattern.permute.xlu0 0
      %776 = vperm.xlu0 %775, %v768
      %v777 = vpop.permute.xlu0 %776
      %v781 = vunpack.c.l.b16 %v759
      %v782 = vunpack.c.l.b16 %v760
      %v783 = vpack.c.b16 %v782, %v781
      %v790 = vunpack.c.l.b16 %v761
      %v791 = vunpack.c.l.b16 %v762
      %v792 = vunpack.c.l.b16 %v763
      %v793 = vunpack.c.l.b16 %v764
      %v794 = vunpack.c.l.b16 %v765
      %v795 = vunpack.c.l.b16 %v766
      %v796 = vpack.c.b16 %v791, %v790
      %v797 = vpack.c.b16 %v793, %v792
      %v798 = vpack.c.b16 %v795, %v794
      %v803 = vsel %vm678, %v783, 0
      %805 = vmatprep.subr.bf16.mxu0 0
      %806 = vmatpush1.bf16.msra.mxu0 0
      %807 = vmatprep.subr.bf16.mxu0 0
      %808 = vmatpush1.bf16.msra.mxu0 0
      %809 = vmatprep.subr.bf16.mxu0 0
      %810 = vmatpush1.bf16.msra.mxu0 0
      %811 = vmatprep.subr.bf16.mxu0 0
      %812 = vmatpush1.bf16.msra.mxu0 0
      %813 = vmatprep.subr.bf16.mxu0 0
      %814 = vmatpush1.bf16.msra.mxu0 0
      %815 = vmatprep.subr.bf16.mxu0 0
      %816 = vmatpush1.bf16.msra.mxu0 %v798
      %817 = vmatprep.subr.bf16.mxu0 0
      %818 = vmatpush1.bf16.msra.mxu0 %v797
      %819 = vmatprep.subr.bf16.mxu0 0
      %820 = vmatpush1.bf16.msra.mxu0 %v796
      %821 = vmatprep.subr.bf16.mxu0 0
      %822 = vmatpush2.bf16.msra.mxu0 0
      %823 = vmatprep.subr.bf16.mxu0 0
      %824 = vmatpush2.bf16.msra.mxu0 0
      %825 = vmatprep.subr.bf16.mxu0 0
      %826 = vmatpush2.bf16.msra.mxu0 0
      %827 = vmatprep.subr.bf16.mxu0 0
      %828 = vmatpush2.bf16.msra.mxu0 0
      %829 = vmatprep.subr.bf16.mxu0 0
      %830 = vmatpush2.bf16.msra.mxu0 0
      %831 = vmatprep.subr.bf16.mxu0 0
      %832 = vmatpush2.bf16.msra.mxu0 0
      %833 = vmatprep.subr.bf16.mxu0 0
      %834 = vmatpush2.bf16.msra.mxu0 0
      %835 = vmatprep.subr.bf16.mxu0 0
      %836 = vmatpush2.bf16.msra.mxu0 0
      %837 = vmatprep.mubr.bf16.mxu0 0
      %838 = vmatmul.mubr.bf16.gmra.mxu0 %v803
      %v839 = vpop.f32.mrf.mxu0
      %v840 = vadd.f32 %v772, %v839
      %v841 = vpop.f32.mrf.mxu0
      %v842 = vpop.f32.mrf.mxu0
      %v843 = vadd.f32 %v777, %v842
      %v844 = vpop.f32.mrf.mxu0
      %845 = vdwg.mxu0
      %vm846 = vcmp.ge.f32.partialorder %v840, 0.0
      %vm847 = vcmp.ge.f32.partialorder %v843, 0.0
      %v848 = vmul.f32 %v840, 0.1
      %v849 = vmul.f32 %v843, 0.1
      %v850 = vsel %vm846, %v840, %v848
      %v851 = vsel %vm847, %v843, %v849
      %v852 = vld [vmem:[%s5] sm:$0xf]
      %v853 = vld [vmem:[%s5 + $0x4] sm:$0xf]
      %v854 = vld [vmem:[%s6] sm:$0xff]
      %v855 = vld [vmem:[%s6 + $0x8] sm:$0xff]
      %857 = vset.pattern.permute.xlu0 0
      %858 = vperm.xlu0 %857, %v854
      %v859 = vpop.permute.xlu0 %858
      %862 = vset.pattern.permute.xlu0 0
      %863 = vperm.xlu0 %862, %v855
      %v864 = vpop.permute.xlu0 %863
      %v868 = vunpack.c.l.b16 %v852
      %v869 = vunpack.c.l.b16 %v853
      %v870 = vpack.c.b16 %v869, %v868
      %v871 = vunpack.c.l.b16 %v604
      %v872 = vunpack.c.l.b16 %v605
      %v873 = vpack.c.b16 %v872, %v871
      %vm875 = vcmask 130048
      %v877 = vsel %vm875, %v870, 0
      %879 = vmatprep.subr.bf16.mxu0 0
      %880 = vmatpush1.bf16.msra.mxu0 0
      %881 = vmatprep.subr.bf16.mxu0 0
      %882 = vmatpush1.bf16.msra.mxu0 0
      %883 = vmatprep.subr.bf16.mxu0 0
      %884 = vmatpush1.bf16.msra.mxu0 0
      %885 = vmatprep.subr.bf16.mxu0 0
      %886 = vmatpush1.bf16.msra.mxu0 0
      %887 = vmatprep.subr.bf16.mxu0 0
      %888 = vmatpush1.bf16.msra.mxu0 0
      %889 = vmatprep.subr.bf16.mxu0 0
      %890 = vmatpush1.bf16.msra.mxu0 0
      %891 = vmatprep.subr.bf16.mxu0 0
      %892 = vmatpush1.bf16.msra.mxu0 0
      %893 = vmatprep.subr.bf16.mxu0 0
      %894 = vmatpush1.bf16.msra.mxu0 %v873
      %895 = vmatprep.subr.bf16.mxu0 0
      %896 = vmatpush2.bf16.msra.mxu0 0
      %897 = vmatprep.subr.bf16.mxu0 0
      %898 = vmatpush2.bf16.msra.mxu0 0
      %899 = vmatprep.subr.bf16.mxu0 0
      %900 = vmatpush2.bf16.msra.mxu0 0
      %901 = vmatprep.subr.bf16.mxu0 0
      %902 = vmatpush2.bf16.msra.mxu0 0
      %903 = vmatprep.subr.bf16.mxu0 0
      %904 = vmatpush2.bf16.msra.mxu0 0
      %905 = vmatprep.subr.bf16.mxu0 0
      %906 = vmatpush2.bf16.msra.mxu0 0
      %907 = vmatprep.subr.bf16.mxu0 0
      %908 = vmatpush2.bf16.msra.mxu0 0
      %909 = vmatprep.subr.bf16.mxu0 0
      %910 = vmatpush2.bf16.msra.mxu0 0
      %911 = vmatprep.mubr.bf16.mxu0 0
      %912 = vmatmul.mubr.bf16.gmra.mxu0 %v877
      %v913 = vpop.f32.mrf.mxu0
      %v914 = vadd.f32 %v859, %v913
      %v915 = vpop.f32.mrf.mxu0
      %v916 = vpop.f32.mrf.mxu0
      %v917 = vadd.f32 %v864, %v916
      %v918 = vpop.f32.mrf.mxu0
      %919 = vdwg.mxu0
      %v920 = vadd.f32 %v850, %v914
      %v921 = vadd.f32 %v851, %v917
      %vm922 = vcmp.ge.f32.partialorder %v920, 0.0
      %vm923 = vcmp.ge.f32.partialorder %v921, 0.0
      %v924 = vmul.f32 %v920, 0.1
      %v925 = vmul.f32 %v921, 0.1
      %v926 = vsel %vm922, %v920, %v924
      %v927 = vsel %vm923, %v921, %v925
      %v928 = vpack.c.bf16 %v927, %v926
      %vm929 = vcmask 27648
      %930 = vst.msk [vmem:[#allocation2] sm:$0xf] %vm929, 0
      %931 = vst.msk [vmem:[#allocation2 + $0x4] sm:$0xf] %vm929, 0
      %v933 = vunpack.c.l.b16 %v928
      %v934 = vunpack.c.h.b16 %v928
      %v935 = vpack.c.b16 %v933, %v933
      %v936 = vpack.c.b16 %v934, %v934
      %937 = vrot.lane.b32.xlu0 %v935, 4
      %v938 = vpop.permute.xlu0 %937
      %939 = vrot.lane.b32.xlu0 %v936, 4
      %v940 = vpop.permute.xlu0 %939
      %vm943 = vcmask 125984
      %944 = vst.msk [vmem:[#allocation2] sm:$0xf] %vm943, %v938
      %945 = vst.msk [vmem:[#allocation2 + $0x4] sm:$0xf] %vm943, %v940
      %946 = vst.msk [vmem:[#allocation2 + $0x8] sm:$0xf] %vm606, 0
      %947 = vst.msk [vmem:[#allocation2 + $0xc] sm:$0xf] %vm606, 0
      %948 = vrot.lane.b32.xlu0 %v935, 2
      %v949 = vpop.permute.xlu0 %948
      %950 = vrot.lane.b32.xlu0 %v936, 2
      %v951 = vpop.permute.xlu0 %950
      %954 = vst.msk [vmem:[#allocation2 + $0x8] sm:$0xf] %vm617, %v949
      %955 = vst.msk [vmem:[#allocation2 + $0xc] sm:$0xf] %vm617, %v951
      %958 = vst.msk [vmem:[#allocation2 + $0x10] sm:$0xf] %vm632, %v935
      %959 = vst.msk [vmem:[#allocation2 + $0x14] sm:$0xf] %vm632, %v936
      %v960 = vld [vmem:[%s7] sm:$0xf]
      %v961 = vld [vmem:[%s7 + $0x4] sm:$0xf]
      %v962 = vld [vmem:[#allocation2] sm:$0xf]
      %v963 = vld [vmem:[#allocation2 + $0x4] sm:$0xf]
      %v964 = vld [vmem:[#allocation2 + $0x8] sm:$0xf]
      %v965 = vld [vmem:[#allocation2 + $0xc] sm:$0xf]
      %v966 = vld [vmem:[#allocation2 + $0x10] sm:$0xf]
      %v967 = vld [vmem:[#allocation2 + $0x14] sm:$0xf]
      %v968 = vld [vmem:[%s8] sm:$0xff]
      %v969 = vld [vmem:[%s8 + $0x8] sm:$0xff]
      %971 = vset.pattern.permute.xlu0 0
      %972 = vperm.xlu0 %971, %v968
      %v973 = vpop.permute.xlu0 %972
      %976 = vset.pattern.permute.xlu0 0
      %977 = vperm.xlu0 %976, %v969
      %v978 = vpop.permute.xlu0 %977
      %v982 = vunpack.c.l.b16 %v960
      %v983 = vunpack.c.l.b16 %v961
      %v984 = vpack.c.b16 %v983, %v982
      %v991 = vunpack.c.l.b16 %v962
      %v992 = vunpack.c.l.b16 %v963
      %v993 = vunpack.c.l.b16 %v964
      %v994 = vunpack.c.l.b16 %v965
      %v995 = vunpack.c.l.b16 %v966
      %v996 = vunpack.c.l.b16 %v967
      %v997 = vpack.c.b16 %v992, %v991
      %v998 = vpack.c.b16 %v994, %v993
      %v999 = vpack.c.b16 %v996, %v995
      %v1004 = vsel %vm678, %v984, 0
      %1006 = vmatprep.subr.bf16.mxu0 0
      %1007 = vmatpush1.bf16.msra.mxu0 0
      %1008 = vmatprep.subr.bf16.mxu0 0
      %1009 = vmatpush1.bf16.msra.mxu0 0
      %1010 = vmatprep.subr.bf16.mxu0 0
      %1011 = vmatpush1.bf16.msra.mxu0 0
      %1012 = vmatprep.subr.bf16.mxu0 0
      %1013 = vmatpush1.bf16.msra.mxu0 0
      %1014 = vmatprep.subr.bf16.mxu0 0
      %1015 = vmatpush1.bf16.msra.mxu0 0
      %1016 = vmatprep.subr.bf16.mxu0 0
      %1017 = vmatpush1.bf16.msra.mxu0 %v999
      %1018 = vmatprep.subr.bf16.mxu0 0
      %1019 = vmatpush1.bf16.msra.mxu0 %v998
      %1020 = vmatprep.subr.bf16.mxu0 0
      %1021 = vmatpush1.bf16.msra.mxu0 %v997
      %1022 = vmatprep.subr.bf16.mxu0 0
      %1023 = vmatpush2.bf16.msra.mxu0 0
      %1024 = vmatprep.subr.bf16.mxu0 0
      %1025 = vmatpush2.bf16.msra.mxu0 0
      %1026 = vmatprep.subr.bf16.mxu0 0
      %1027 = vmatpush2.bf16.msra.mxu0 0
      %1028 = vmatprep.subr.bf16.mxu0 0
      %1029 = vmatpush2.bf16.msra.mxu0 0
      %1030 = vmatprep.subr.bf16.mxu0 0
      %1031 = vmatpush2.bf16.msra.mxu0 0
      %1032 = vmatprep.subr.bf16.mxu0 0
      %1033 = vmatpush2.bf16.msra.mxu0 0
      %1034 = vmatprep.subr.bf16.mxu0 0
      %1035 = vmatpush2.bf16.msra.mxu0 0
      %1036 = vmatprep.subr.bf16.mxu0 0
      %1037 = vmatpush2.bf16.msra.mxu0 0
      %1038 = vmatprep.mubr.bf16.mxu0 0
      %1039 = vmatmul.mubr.bf16.gmra.mxu0 %v1004
      %v1040 = vpop.f32.mrf.mxu0
      %v1041 = vadd.f32 %v973, %v1040
      %v1042 = vpop.f32.mrf.mxu0
      %v1043 = vpop.f32.mrf.mxu0
      %v1044 = vadd.f32 %v978, %v1043
      %v1045 = vpop.f32.mrf.mxu0
      %1046 = vdwg.mxu0
      %vm1047 = vcmp.ge.f32.partialorder %v1041, 0.0
      %vm1048 = vcmp.ge.f32.partialorder %v1044, 0.0
      %v1049 = vmul.f32 %v1041, 0.1
      %v1050 = vmul.f32 %v1044, 0.1
      %v1051 = vsel %vm1047, %v1041, %v1049
      %v1052 = vsel %vm1048, %v1044, %v1050
      %v1053 = vpack.c.bf16 %v1052, %v1051
      %1054 = vst.msk [vmem:[#allocation2] sm:$0xf] %vm929, 0
      %1055 = vst.msk [vmem:[#allocation2 + $0x4] sm:$0xf] %vm929, 0
      %v1057 = vunpack.c.l.b16 %v1053
      %v1058 = vunpack.c.h.b16 %v1053
      %v1059 = vpack.c.b16 %v1057, %v1057
      %v1060 = vpack.c.b16 %v1058, %v1058
      %1061 = vrot.lane.b32.xlu0 %v1059, 4
      %v1062 = vpop.permute.xlu0 %1061
      %1063 = vrot.lane.b32.xlu0 %v1060, 4
      %v1064 = vpop.permute.xlu0 %1063
      %1067 = vst.msk [vmem:[#allocation2] sm:$0xf] %vm943, %v1062
      %1068 = vst.msk [vmem:[#allocation2 + $0x4] sm:$0xf] %vm943, %v1064
      %1069 = vst.msk [vmem:[#allocation2 + $0x8] sm:$0xf] %vm606, 0
      %1070 = vst.msk [vmem:[#allocation2 + $0xc] sm:$0xf] %vm606, 0
      %1071 = vrot.lane.b32.xlu0 %v1059, 2
      %v1072 = vpop.permute.xlu0 %1071
      %1073 = vrot.lane.b32.xlu0 %v1060, 2
      %v1074 = vpop.permute.xlu0 %1073
      %1077 = vst.msk [vmem:[#allocation2 + $0x8] sm:$0xf] %vm617, %v1072
      %1078 = vst.msk [vmem:[#allocation2 + $0xc] sm:$0xf] %vm617, %v1074
      %1081 = vst.msk [vmem:[#allocation2 + $0x10] sm:$0xf] %vm632, %v1059
      %1082 = vst.msk [vmem:[#allocation2 + $0x14] sm:$0xf] %vm632, %v1060
      %v1083 = vld [vmem:[%s9] sm:$0xf]
      %v1084 = vld [vmem:[%s9 + $0x4] sm:$0xf]
      %v1085 = vld [vmem:[#allocation2] sm:$0xf]
      %v1086 = vld [vmem:[#allocation2 + $0x4] sm:$0xf]
      %v1087 = vld [vmem:[#allocation2 + $0x8] sm:$0xf]
      %v1088 = vld [vmem:[#allocation2 + $0xc] sm:$0xf]
      %v1089 = vld [vmem:[#allocation2 + $0x10] sm:$0xf]
      %v1090 = vld [vmem:[#allocation2 + $0x14] sm:$0xf]
      %v1091 = vld [vmem:[%s10] sm:$0xff]
      %v1092 = vld [vmem:[%s10 + $0x8] sm:$0xff]
      %1094 = vset.pattern.permute.xlu0 0
      %1095 = vperm.xlu0 %1094, %v1091
      %v1096 = vpop.permute.xlu0 %1095
      %1099 = vset.pattern.permute.xlu0 0
      %1100 = vperm.xlu0 %1099, %v1092
      %v1101 = vpop.permute.xlu0 %1100
      %v1105 = vunpack.c.l.b16 %v1083
      %v1106 = vunpack.c.l.b16 %v1084
      %v1107 = vpack.c.b16 %v1106, %v1105
      %v1114 = vunpack.c.l.b16 %v1085
      %v1115 = vunpack.c.l.b16 %v1086
      %v1116 = vunpack.c.l.b16 %v1087
      %v1117 = vunpack.c.l.b16 %v1088
      %v1118 = vunpack.c.l.b16 %v1089
      %v1119 = vunpack.c.l.b16 %v1090
      %v1120 = vpack.c.b16 %v1115, %v1114
      %v1121 = vpack.c.b16 %v1117, %v1116
      %v1122 = vpack.c.b16 %v1119, %v1118
      %v1127 = vsel %vm678, %v1107, 0
      %1129 = vmatprep.subr.bf16.mxu0 0
      %1130 = vmatpush1.bf16.msra.mxu0 0
      %1131 = vmatprep.subr.bf16.mxu0 0
      %1132 = vmatpush1.bf16.msra.mxu0 0
      %1133 = vmatprep.subr.bf16.mxu0 0
      %1134 = vmatpush1.bf16.msra.mxu0 0
      %1135 = vmatprep.subr.bf16.mxu0 0
      %1136 = vmatpush1.bf16.msra.mxu0 0
      %1137 = vmatprep.subr.bf16.mxu0 0
      %1138 = vmatpush1.bf16.msra.mxu0 0
      %1139 = vmatprep.subr.bf16.mxu0 0
      %1140 = vmatpush1.bf16.msra.mxu0 %v1122
      %1141 = vmatprep.subr.bf16.mxu0 0
      %1142 = vmatpush1.bf16.msra.mxu0 %v1121
      %1143 = vmatprep.subr.bf16.mxu0 0
      %1144 = vmatpush1.bf16.msra.mxu0 %v1120
      %1145 = vmatprep.subr.bf16.mxu0 0
      %1146 = vmatpush2.bf16.msra.mxu0 0
      %1147 = vmatprep.subr.bf16.mxu0 0
      %1148 = vmatpush2.bf16.msra.mxu0 0
      %1149 = vmatprep.subr.bf16.mxu0 0
      %1150 = vmatpush2.bf16.msra.mxu0 0
      %1151 = vmatprep.subr.bf16.mxu0 0
      %1152 = vmatpush2.bf16.msra.mxu0 0
      %1153 = vmatprep.subr.bf16.mxu0 0
      %1154 = vmatpush2.bf16.msra.mxu0 0
      %1155 = vmatprep.subr.bf16.mxu0 0
      %1156 = vmatpush2.bf16.msra.mxu0 0
      %1157 = vmatprep.subr.bf16.mxu0 0
      %1158 = vmatpush2.bf16.msra.mxu0 0
      %1159 = vmatprep.subr.bf16.mxu0 0
      %1160 = vmatpush2.bf16.msra.mxu0 0
      %1161 = vmatprep.mubr.bf16.mxu0 0
      %1162 = vmatmul.mubr.bf16.gmra.mxu0 %v1127
      %v1163 = vpop.f32.mrf.mxu0
      %v1164 = vadd.f32 %v1096, %v1163
      %v1165 = vpop.f32.mrf.mxu0
      %v1166 = vpop.f32.mrf.mxu0
      %v1167 = vadd.f32 %v1101, %v1166
      %v1168 = vpop.f32.mrf.mxu0
      %1169 = vdwg.mxu0
      %vm1170 = vcmp.ge.f32.partialorder %v1164, 0.0
      %vm1171 = vcmp.ge.f32.partialorder %v1167, 0.0
      %v1172 = vmul.f32 %v1164, 0.1
      %v1173 = vmul.f32 %v1167, 0.1
      %v1174 = vsel %vm1170, %v1164, %v1172
      %v1175 = vsel %vm1171, %v1167, %v1173
      %v1176 = vunpack.c.l.bf16 %v928
      %v1177 = vunpack.c.h.bf16 %v928
      %v1178 = vadd.f32 %v1174, %v1176
      %v1179 = vadd.f32 %v1175, %v1177
      %vm1180 = vcmp.ge.f32.partialorder %v1178, 0.0
      %vm1181 = vcmp.ge.f32.partialorder %v1179, 0.0
      %v1182 = vmul.f32 %v1178, 0.1
      %v1183 = vmul.f32 %v1179, 0.1
      %v1184 = vsel %vm1180, %v1178, %v1182
      %v1185 = vsel %vm1181, %v1179, %v1183
      %v1186 = vpack.c.bf16 %v1185, %v1184
      %vm1187 = vcmask 60416
      %1188 = vst.msk [vmem:[#allocation2] sm:$0xf] %vm1187, 0
      %1189 = vst.msk [vmem:[#allocation2 + $0x4] sm:$0xf] %vm1187, 0
      %v1191 = vunpack.c.l.b16 %v1186
      %v1192 = vunpack.c.h.b16 %v1186
      %v1193 = vpack.c.b16 %v1191, %v1191
      %v1194 = vpack.c.b16 %v1192, %v1192
      %1195 = vrot.lane.b32.xlu0 %v1193, 8
      %v1196 = vpop.permute.xlu0 %1195
      %1197 = vrot.lane.b32.xlu0 %v1194, 8
      %v1198 = vpop.permute.xlu0 %1197
      %vm1201 = vcmask 126016
      %1202 = vst.msk [vmem:[#allocation2] sm:$0xf] %vm1201, %v1196
      %1203 = vst.msk [vmem:[#allocation2 + $0x4] sm:$0xf] %vm1201, %v1198
      %1204 = vst.msk [vmem:[#allocation2 + $0x8] sm:$0xf] %vm929, 0
      %1205 = vst.msk [vmem:[#allocation2 + $0xc] sm:$0xf] %vm929, 0
      %1206 = vrot.lane.b32.xlu0 %v1193, 4
      %v1207 = vpop.permute.xlu0 %1206
      %1208 = vrot.lane.b32.xlu0 %v1194, 4
      %v1209 = vpop.permute.xlu0 %1208
      %1212 = vst.msk [vmem:[#allocation2 + $0x8] sm:$0xf] %vm943, %v1207
      %1213 = vst.msk [vmem:[#allocation2 + $0xc] sm:$0xf] %vm943, %v1209
      %1216 = vst.msk [vmem:[#allocation2 + $0x10] sm:$0xf] %vm632, %v1193
      %1217 = vst.msk [vmem:[#allocation2 + $0x14] sm:$0xf] %vm632, %v1194
      %v1218 = vld [vmem:[%s11] sm:$0xf]
      %v1219 = vld [vmem:[%s11 + $0x4] sm:$0xf]
      %v1220 = vld [vmem:[#allocation2] sm:$0xf]
      %v1221 = vld [vmem:[#allocation2 + $0x4] sm:$0xf]
      %v1222 = vld [vmem:[#allocation2 + $0x8] sm:$0xf]
      %v1223 = vld [vmem:[#allocation2 + $0xc] sm:$0xf]
      %v1224 = vld [vmem:[#allocation2 + $0x10] sm:$0xf]
      %v1225 = vld [vmem:[#allocation2 + $0x14] sm:$0xf]
      %v1226 = vld [vmem:[%s12] sm:$0xff]
      %v1227 = vld [vmem:[%s12 + $0x8] sm:$0xff]
      %1229 = vset.pattern.permute.xlu0 0
      %1230 = vperm.xlu0 %1229, %v1226
      %v1231 = vpop.permute.xlu0 %1230
      %1234 = vset.pattern.permute.xlu0 0
      %1235 = vperm.xlu0 %1234, %v1227
      %v1236 = vpop.permute.xlu0 %1235
      %v1240 = vunpack.c.l.b16 %v1218
      %v1241 = vunpack.c.l.b16 %v1219
      %v1242 = vpack.c.b16 %v1241, %v1240
      %v1249 = vunpack.c.l.b16 %v1220
      %v1250 = vunpack.c.l.b16 %v1221
      %v1251 = vunpack.c.l.b16 %v1222
      %v1252 = vunpack.c.l.b16 %v1223
      %v1253 = vunpack.c.l.b16 %v1224
      %v1254 = vunpack.c.l.b16 %v1225
      %v1255 = vpack.c.b16 %v1250, %v1249
      %v1256 = vpack.c.b16 %v1252, %v1251
      %v1257 = vpack.c.b16 %v1254, %v1253
      %v1262 = vsel %vm678, %v1242, 0
      %1264 = vmatprep.subr.bf16.mxu0 0
      %1265 = vmatpush1.bf16.msra.mxu0 0
      %1266 = vmatprep.subr.bf16.mxu0 0
      %1267 = vmatpush1.bf16.msra.mxu0 0
      %1268 = vmatprep.subr.bf16.mxu0 0
      %1269 = vmatpush1.bf16.msra.mxu0 0
      %1270 = vmatprep.subr.bf16.mxu0 0
      %1271 = vmatpush1.bf16.msra.mxu0 0
      %1272 = vmatprep.subr.bf16.mxu0 0
      %1273 = vmatpush1.bf16.msra.mxu0 0
      %1274 = vmatprep.subr.bf16.mxu0 0
      %1275 = vmatpush1.bf16.msra.mxu0 %v1257
      %1276 = vmatprep.subr.bf16.mxu0 0
      %1277 = vmatpush1.bf16.msra.mxu0 %v1256
      %1278 = vmatprep.subr.bf16.mxu0 0
      %1279 = vmatpush1.bf16.msra.mxu0 %v1255
      %1280 = vmatprep.subr.bf16.mxu0 0
      %1281 = vmatpush2.bf16.msra.mxu0 0
      %1282 = vmatprep.subr.bf16.mxu0 0
      %1283 = vmatpush2.bf16.msra.mxu0 0
      %1284 = vmatprep.subr.bf16.mxu0 0
      %1285 = vmatpush2.bf16.msra.mxu0 0
      %1286 = vmatprep.subr.bf16.mxu0 0
      %1287 = vmatpush2.bf16.msra.mxu0 0
      %1288 = vmatprep.subr.bf16.mxu0 0
      %1289 = vmatpush2.bf16.msra.mxu0 0
      %1290 = vmatprep.subr.bf16.mxu0 0
      %1291 = vmatpush2.bf16.msra.mxu0 0
      %1292 = vmatprep.subr.bf16.mxu0 0
      %1293 = vmatpush2.bf16.msra.mxu0 0
      %1294 = vmatprep.subr.bf16.mxu0 0
      %1295 = vmatpush2.bf16.msra.mxu0 0
      %1296 = vmatprep.mubr.bf16.mxu0 0
      %1297 = vmatmul.mubr.bf16.gmra.mxu0 %v1262
      %v1298 = vpop.f32.mrf.mxu0
      %v1299 = vadd.f32 %v1231, %v1298
      %v1300 = vpop.f32.mrf.mxu0
      %v1301 = vpop.f32.mrf.mxu0
      %v1302 = vadd.f32 %v1236, %v1301
      %v1303 = vpop.f32.mrf.mxu0
      %1304 = vdwg.mxu0
      %vm1305 = vcmp.ge.f32.partialorder %v1299, 0.0
      %vm1306 = vcmp.ge.f32.partialorder %v1302, 0.0
      %v1307 = vmul.f32 %v1299, 0.1
      %v1308 = vmul.f32 %v1302, 0.1
      %v1309 = vsel %vm1305, %v1299, %v1307
      %v1310 = vsel %vm1306, %v1302, %v1308
      %v1311 = vpack.c.bf16 %v1310, %v1309
      %1312 = vst.msk [vmem:[#allocation2] sm:$0xf] %vm1187, 0
      %1313 = vst.msk [vmem:[#allocation2 + $0x4] sm:$0xf] %vm1187, 0
      %v1315 = vunpack.c.l.b16 %v1311
      %v1316 = vunpack.c.h.b16 %v1311
      %v1317 = vpack.c.b16 %v1315, %v1315
      %v1318 = vpack.c.b16 %v1316, %v1316
      %1319 = vrot.lane.b32.xlu0 %v1317, 8
      %v1320 = vpop.permute.xlu0 %1319
      %1321 = vrot.lane.b32.xlu0 %v1318, 8
      %v1322 = vpop.permute.xlu0 %1321
      %1325 = vst.msk [vmem:[#allocation2] sm:$0xf] %vm1201, %v1320
      %1326 = vst.msk [vmem:[#allocation2 + $0x4] sm:$0xf] %vm1201, %v1322
      %1327 = vst.msk [vmem:[#allocation2 + $0x8] sm:$0xf] %vm929, 0
      %1328 = vst.msk [vmem:[#allocation2 + $0xc] sm:$0xf] %vm929, 0
      %1329 = vrot.lane.b32.xlu0 %v1317, 4
      %v1330 = vpop.permute.xlu0 %1329
      %1331 = vrot.lane.b32.xlu0 %v1318, 4
      %v1332 = vpop.permute.xlu0 %1331
      %1335 = vst.msk [vmem:[#allocation2 + $0x8] sm:$0xf] %vm943, %v1330
      %1336 = vst.msk [vmem:[#allocation2 + $0xc] sm:$0xf] %vm943, %v1332
      %1339 = vst.msk [vmem:[#allocation2 + $0x10] sm:$0xf] %vm632, %v1317
      %1340 = vst.msk [vmem:[#allocation2 + $0x14] sm:$0xf] %vm632, %v1318
      %v1341 = vld [vmem:[%s13] sm:$0xf]
      %v1342 = vld [vmem:[%s13 + $0x4] sm:$0xf]
      %v1343 = vld [vmem:[#allocation2] sm:$0xf]
      %v1344 = vld [vmem:[#allocation2 + $0x4] sm:$0xf]
      %v1345 = vld [vmem:[#allocation2 + $0x8] sm:$0xf]
      %v1346 = vld [vmem:[#allocation2 + $0xc] sm:$0xf]
      %v1347 = vld [vmem:[#allocation2 + $0x10] sm:$0xf]
      %v1348 = vld [vmem:[#allocation2 + $0x14] sm:$0xf]
      %v1349 = vld [vmem:[%s14] sm:$0xff]
      %v1350 = vld [vmem:[%s14 + $0x8] sm:$0xff]
      %1352 = vset.pattern.permute.xlu0 0
      %1353 = vperm.xlu0 %1352, %v1349
      %v1354 = vpop.permute.xlu0 %1353
      %1357 = vset.pattern.permute.xlu0 0
      %1358 = vperm.xlu0 %1357, %v1350
      %v1359 = vpop.permute.xlu0 %1358
      %v1363 = vunpack.c.l.b16 %v1341
      %v1364 = vunpack.c.l.b16 %v1342
      %v1365 = vpack.c.b16 %v1364, %v1363
      %v1372 = vunpack.c.l.b16 %v1343
      %v1373 = vunpack.c.l.b16 %v1344
      %v1374 = vunpack.c.l.b16 %v1345
      %v1375 = vunpack.c.l.b16 %v1346
      %v1376 = vunpack.c.l.b16 %v1347
      %v1377 = vunpack.c.l.b16 %v1348
      %v1378 = vpack.c.b16 %v1373, %v1372
      %v1379 = vpack.c.b16 %v1375, %v1374
      %v1380 = vpack.c.b16 %v1377, %v1376
      %v1385 = vsel %vm678, %v1365, 0
      %1387 = vmatprep.subr.bf16.mxu0 0
      %1388 = vmatpush1.bf16.msra.mxu0 0
      %1389 = vmatprep.subr.bf16.mxu0 0
      %1390 = vmatpush1.bf16.msra.mxu0 0
      %1391 = vmatprep.subr.bf16.mxu0 0
      %1392 = vmatpush1.bf16.msra.mxu0 0
      %1393 = vmatprep.subr.bf16.mxu0 0
      %1394 = vmatpush1.bf16.msra.mxu0 0
      %1395 = vmatprep.subr.bf16.mxu0 0
      %1396 = vmatpush1.bf16.msra.mxu0 0
      %1397 = vmatprep.subr.bf16.mxu0 0
      %1398 = vmatpush1.bf16.msra.mxu0 %v1380
      %1399 = vmatprep.subr.bf16.mxu0 0
      %1400 = vmatpush1.bf16.msra.mxu0 %v1379
      %1401 = vmatprep.subr.bf16.mxu0 0
      %1402 = vmatpush1.bf16.msra.mxu0 %v1378
      %1403 = vmatprep.subr.bf16.mxu0 0
      %1404 = vmatpush2.bf16.msra.mxu0 0
      %1405 = vmatprep.subr.bf16.mxu0 0
      %1406 = vmatpush2.bf16.msra.mxu0 0
      %1407 = vmatprep.subr.bf16.mxu0 0
      %1408 = vmatpush2.bf16.msra.mxu0 0
      %1409 = vmatprep.subr.bf16.mxu0 0
      %1410 = vmatpush2.bf16.msra.mxu0 0
      %1411 = vmatprep.subr.bf16.mxu0 0
      %1412 = vmatpush2.bf16.msra.mxu0 0
      %1413 = vmatprep.subr.bf16.mxu0 0
      %1414 = vmatpush2.bf16.msra.mxu0 0
      %1415 = vmatprep.subr.bf16.mxu0 0
      %1416 = vmatpush2.bf16.msra.mxu0 0
      %1417 = vmatprep.subr.bf16.mxu0 0
      %1418 = vmatpush2.bf16.msra.mxu0 0
      %1419 = vmatprep.mubr.bf16.mxu0 0
      %1420 = vmatmul.mubr.bf16.gmra.mxu0 %v1385
      %v1421 = vpop.f32.mrf.mxu0
      %v1422 = vadd.f32 %v1354, %v1421
      %v1423 = vpop.f32.mrf.mxu0
      %v1424 = vpop.f32.mrf.mxu0
      %v1425 = vadd.f32 %v1359, %v1424
      %v1426 = vpop.f32.mrf.mxu0
      %1427 = vdwg.mxu0
      %vm1428 = vcmp.ge.f32.partialorder %v1422, 0.0
      %vm1429 = vcmp.ge.f32.partialorder %v1425, 0.0
      %v1430 = vmul.f32 %v1422, 0.1
      %v1431 = vmul.f32 %v1425, 0.1
      %v1432 = vsel %vm1428, %v1422, %v1430
      %v1433 = vsel %vm1429, %v1425, %v1431
      %v1434 = vld [vmem:[%s15] sm:$0xf]
      %v1435 = vld [vmem:[%s15 + $0x4] sm:$0xf]
      %v1436 = vld [vmem:[%s16] sm:$0xff]
      %v1437 = vld [vmem:[%s16 + $0x8] sm:$0xff]
      %1439 = vset.pattern.permute.xlu0 0
      %1440 = vperm.xlu0 %1439, %v1436
      %v1441 = vpop.permute.xlu0 %1440
      %1444 = vset.pattern.permute.xlu0 0
      %1445 = vperm.xlu0 %1444, %v1437
      %v1446 = vpop.permute.xlu0 %1445
      %v1450 = vunpack.c.l.b16 %v1434
      %v1451 = vunpack.c.l.b16 %v1435
      %v1452 = vpack.c.b16 %v1451, %v1450
      %v1454 = vsel %vm875, %v1452, 0
      %1456 = vmatprep.subr.bf16.mxu0 0
      %1457 = vmatpush1.bf16.msra.mxu0 0
      %1458 = vmatprep.subr.bf16.mxu0 0
      %1459 = vmatpush1.bf16.msra.mxu0 0
      %1460 = vmatprep.subr.bf16.mxu0 0
      %1461 = vmatpush1.bf16.msra.mxu0 0
      %1462 = vmatprep.subr.bf16.mxu0 0
      %1463 = vmatpush1.bf16.msra.mxu0 0
      %1464 = vmatprep.subr.bf16.mxu0 0
      %1465 = vmatpush1.bf16.msra.mxu0 0
      %1466 = vmatprep.subr.bf16.mxu0 0
      %1467 = vmatpush1.bf16.msra.mxu0 0
      %1468 = vmatprep.subr.bf16.mxu0 0
      %1469 = vmatpush1.bf16.msra.mxu0 0
      %1470 = vmatprep.subr.bf16.mxu0 0
      %1471 = vmatpush1.bf16.msra.mxu0 %v1186
      %1472 = vmatprep.subr.bf16.mxu0 0
      %1473 = vmatpush2.bf16.msra.mxu0 0
      %1474 = vmatprep.subr.bf16.mxu0 0
      %1475 = vmatpush2.bf16.msra.mxu0 0
      %1476 = vmatprep.subr.bf16.mxu0 0
      %1477 = vmatpush2.bf16.msra.mxu0 0
      %1478 = vmatprep.subr.bf16.mxu0 0
      %1479 = vmatpush2.bf16.msra.mxu0 0
      %1480 = vmatprep.subr.bf16.mxu0 0
      %1481 = vmatpush2.bf16.msra.mxu0 0
      %1482 = vmatprep.subr.bf16.mxu0 0
      %1483 = vmatpush2.bf16.msra.mxu0 0
      %1484 = vmatprep.subr.bf16.mxu0 0
      %1485 = vmatpush2.bf16.msra.mxu0 0
      %1486 = vmatprep.subr.bf16.mxu0 0
      %1487 = vmatpush2.bf16.msra.mxu0 0
      %1488 = vmatprep.mubr.bf16.mxu0 0
      %1489 = vmatmul.mubr.bf16.gmra.mxu0 %v1454
      %v1490 = vpop.f32.mrf.mxu0
      %v1491 = vadd.f32 %v1441, %v1490
      %v1492 = vpop.f32.mrf.mxu0
      %v1493 = vpop.f32.mrf.mxu0
      %v1494 = vadd.f32 %v1446, %v1493
      %v1495 = vpop.f32.mrf.mxu0
      %1496 = vdwg.mxu0
      %v1497 = vadd.f32 %v1432, %v1491
      %v1498 = vadd.f32 %v1433, %v1494
      %vm1499 = vcmp.ge.f32.partialorder %v1497, 0.0
      %vm1500 = vcmp.ge.f32.partialorder %v1498, 0.0
      %v1501 = vmul.f32 %v1497, 0.1
      %v1502 = vmul.f32 %v1498, 0.1
      %v1503 = vsel %vm1499, %v1497, %v1501
      %v1504 = vsel %vm1500, %v1498, %v1502
      %v1505 = vpack.c.bf16 %v1504, %v1503
      %v1506 = vld [vmem:[%s17] sm:$0xf]
      %v1507 = vld [vmem:[%s17 + $0x4] sm:$0xf]
      %v1508 = vld [vmem:[%s18] sm:$0xff]
      %v1509 = vld [vmem:[%s18 + $0x8] sm:$0xff]
      %1511 = vset.pattern.permute.xlu0 0
      %1512 = vperm.xlu0 %1511, %v1508
      %v1513 = vpop.permute.xlu0 %1512
      %1516 = vset.pattern.permute.xlu0 0
      %1517 = vperm.xlu0 %1516, %v1509
      %v1518 = vpop.permute.xlu0 %1517
      %v1522 = vunpack.c.l.b16 %v1506
      %v1523 = vunpack.c.l.b16 %v1507
      %v1524 = vpack.c.b16 %v1523, %v1522
      %v1526 = vsel %vm875, %v1524, 0
      %1528 = vmatprep.subr.bf16.mxu0 0
      %1529 = vmatpush1.bf16.msra.mxu0 0
      %1530 = vmatprep.subr.bf16.mxu0 0
      %1531 = vmatpush1.bf16.msra.mxu0 0
      %1532 = vmatprep.subr.bf16.mxu0 0
      %1533 = vmatpush1.bf16.msra.mxu0 0
      %1534 = vmatprep.subr.bf16.mxu0 0
      %1535 = vmatpush1.bf16.msra.mxu0 0
      %1536 = vmatprep.subr.bf16.mxu0 0
      %1537 = vmatpush1.bf16.msra.mxu0 0
      %1538 = vmatprep.subr.bf16.mxu0 0
      %1539 = vmatpush1.bf16.msra.mxu0 0
      %1540 = vmatprep.subr.bf16.mxu0 0
      %1541 = vmatpush1.bf16.msra.mxu0 0
      %1542 = vmatprep.subr.bf16.mxu0 0
      %1543 = vmatpush1.bf16.msra.mxu0 %v1505
      %1544 = vmatprep.subr.bf16.mxu0 0
      %1545 = vmatpush2.bf16.msra.mxu0 0
      %1546 = vmatprep.subr.bf16.mxu0 0
      %1547 = vmatpush2.bf16.msra.mxu0 0
      %1548 = vmatprep.subr.bf16.mxu0 0
      %1549 = vmatpush2.bf16.msra.mxu0 0
      %1550 = vmatprep.subr.bf16.mxu0 0
      %1551 = vmatpush2.bf16.msra.mxu0 0
      %1552 = vmatprep.subr.bf16.mxu0 0
      %1553 = vmatpush2.bf16.msra.mxu0 0
      %1554 = vmatprep.subr.bf16.mxu0 0
      %1555 = vmatpush2.bf16.msra.mxu0 0
      %1556 = vmatprep.subr.bf16.mxu0 0
      %1557 = vmatpush2.bf16.msra.mxu0 0
      %1558 = vmatprep.subr.bf16.mxu0 0
      %1559 = vmatpush2.bf16.msra.mxu0 0
      %1560 = vmatprep.mubr.bf16.mxu0 0
      %1561 = vmatmul.mubr.bf16.gmra.mxu0 %v1526
      %v1562 = vpop.f32.mrf.mxu0
      %v1563 = vadd.f32 %v1513, %v1562
      %v1564 = vpop.f32.mrf.mxu0
      %v1565 = vpop.f32.mrf.mxu0
      %v1566 = vadd.f32 %v1518, %v1565
      %v1567 = vpop.f32.mrf.mxu0
      %1568 = vdwg.mxu0
      %1569 = vst.msk [vmem:[%s602] sm:$0xff] %vm875, %v1563
      %1570 = vst.msk [vmem:[%s602 + $0x8] sm:$0xff] %vm875, %v1566
      %p1571 = scmp.lt.s32.totalorder %s30, 1
      %s1572 = scalar_select %p1571, %s30, 1
      %s1573 = smul.addr %s1572, 2
      %s1574 = smul.addr %s1573, 8
      %s1575 = scalar_lea.vmem %s19, %s1574
      // Predicated region
      $region97: #{tcn_forward.1} parent=95 // pred_check
        %p1576 = pneg %p452
      $region98: #{tcn_forward.1} parent=95 // pred_check_branch
        %1578 = sbr.rel (%p1576) target = $region100
      $region99: #{tcn_forward.1} parent=95 // pred_region
        _
      $region100: #{tcn_forward.1} parent=95 // pred_fallthru
        _
    $region96: #{tcn_forward.1} parent=5 // pred_fallthru
      _
    %p1579 = scmp.le.s32.totalorder 2, %s25
    // Predicated region
    $region101: #{tcn_forward.1} parent=5 // pred_check
      %p1580 = pneg %p1579
    $region102: #{tcn_forward.1} parent=5 // pred_check_branch
      %1582 = sbr.rel (%p1580) target = $region104
    $region103: #{tcn_forward.1} parent=5 // pred_region
      %s1583 = ssub.s32 %s25, 2
      // Predicated region
      $region105: #{tcn_forward.1} parent=103 // pred_check
        %p1584 = pneg %p458
      $region106: #{tcn_forward.1} parent=103 // pred_check_branch
        %1586 = sbr.rel (%p1584) target = $region108
      $region107: #{tcn_forward.1} parent=103 // pred_region
        %p1587 = scmp.lt.s32.totalorder %s31, 1
        %s1588 = scalar_select %p1587, %s31, 1
        %s1589 = smul.addr %s1588, 2
        %s1590 = smul.addr %s1589, 8
        %s1591 = scalar_lea.vmem %s19, %s1590
      $region108: #{tcn_forward.1} parent=103 // pred_fallthru
        _
    $region104: #{tcn_forward.1} parent=5 // pred_fallthru
      _
  $region6: #{tcn_forward.1} parent=0 // loop_footer
    %s29 = sadd.s32 1, %s25
  $region7: #{tcn_forward.1} parent=0 // loop_footer_branch
    %24 = sbr.rel target = $region3
  $region8: #{tcn_forward.1} parent=0 // loop_exit
    _

</llo_original>
